<compile_context>
chip_gen: v6e
topology: v6e:2x2x1
jax: 0.10.0
libtpu: 0.0.40
codegen_flags: <defaults>
</compile_context>

<pallas_src>
import jax
import jax.numpy as jnp
from jax import lax
from jax.experimental import pallas as pl
from jax.experimental.pallas import tpu as pltpu

BN_EPS = 1e-5
LANE = 128


def _round_up(x, m):
    return (x + m - 1) // m * m


def _gnn_fused_kernel(x_ref, src_ref, dst_ref, dst_t_ref, e_ref,
                      w0_ref, b0_ref, gamma_ref, beta_ref,
                      wi_ref, wj_ref, we_ref,
                      o_ref):
    """Fused: Linear+BN+ReLU embed, then L CGConv layers (residual + ReLU)."""
    # ---- initial embed: Linear + BatchNorm1d (batch statistics) + ReLU ------
    # TODO(synk): PyTorch eval-mode running_mean/var is not modeled (a fresh
    # module defaults to training=True, i.e. batch stats, which is what we do).
    h = jnp.dot(x_ref[...], w0_ref[...],
                preferred_element_type=jnp.float32) + b0_ref[...]
    mean = jnp.mean(h, axis=0, keepdims=True)
    var = jnp.mean((h - mean) ** 2, axis=0, keepdims=True)
    h = (h - mean) * lax.rsqrt(var + BN_EPS) * gamma_ref[...] + beta_ref[...]
    h = jnp.maximum(h, 0.0)                                   # [N, CP] f32

    n_nodes, cp = h.shape
    e = e_ref[...]                          # [E, D+1] bf16 (last col = 1 -> bias)
    n_edges = e.shape[0]

    src = src_ref[...]                      # [E, 1] int32 (source j)
    dst = dst_ref[...]                      # [E, 1] int32 (target i)

    # ---- one-hot gather / scatter matrices: built once, reused every layer --
    # combined gather: columns [0, N) pick x_i (dst), columns [N, 2N) pick x_j
    col2 = lax.broadcasted_iota(jnp.int32, (n_edges, 2 * n_nodes), 1)
    oh_gather = jnp.logical_or(col2 == dst,
                               col2 == src + n_nodes).astype(jnp.bfloat16)  # [E, 2N]
    # scatter-add onto destination nodes, built as [N, E] (no transposed operand)
    row_ids = lax.broadcasted_iota(jnp.int32, (n_nodes, n_edges), 0)
    oh_scatter = (dst_t_ref[...] == row_ids).astype(jnp.bfloat16)           # [N, E]

    num_layers = wi_ref.shape[0]
    for l in range(num_layers):             # static unroll (L is small)
        hb = h.astype(jnp.bfloat16)
        # Project node features BEFORE gathering; wi/wj/we hold the
        # column-stacked [wf | ws] blocks, so one matmul chain yields both
        # gate (f) and softplus (s) pre-activations. Bias rides in we as the
        # last row (ones-column of e).
        pi = jnp.dot(hb, wi_ref[l], preferred_element_type=jnp.float32)   # [N, 2CP]
        pj = jnp.dot(hb, wj_ref[l], preferred_element_type=jnp.float32)   # [N, 2CP]
        pe = jnp.dot(e, we_ref[l], preferred_element_type=jnp.float32)    # [E, 2CP]
        p_cat = jnp.concatenate([pi, pj], axis=0).astype(jnp.bfloat16)    # [2N, 2CP]
        fs = jnp.dot(oh_gather, p_cat,
                     preferred_element_type=jnp.float32) + pe             # [E, 2CP]
        f = fs[:, :cp]                       # lane-tile-aligned slices (cp = 128k)
        s = fs[:, cp:]
        gate = jax.nn.sigmoid(f)             # f32 elementwise (EUP)
        softplus = jnp.maximum(s, 0.0) + jnp.log1p(jnp.exp(-jnp.abs(s)))
        msg = (gate * softplus).astype(jnp.bfloat16)                       # [E, CP]
        # scatter-add messages onto destination nodes (canonical MXU matmul)
        agg = jnp.dot(oh_scatter, msg, preferred_element_type=jnp.float32)  # [N, CP]
        h = jnp.maximum(h + agg, 0.0)        # CGConvLayer: residual + ReLU

    o_ref[...] = h                           # lane-dense [N, CP] store


# --------------------------------------------------------------------------
# Parameter construction (PyTorch nn.Linear default init, stored as [in, out]).
# --------------------------------------------------------------------------
def _linear_init(key, fan_in, fan_out):
    kw, kb = jax.random.split(key)
    bound = 1.0 / jnp.sqrt(fan_in)
    w = jax.random.uniform(kw, (fan_in, fan_out), jnp.float32, -bound, bound)
    b = jax.random.uniform(kb, (1, fan_out), jnp.float32, -bound, bound)
    return w, b


def init_gnn_params(key, node_dim, edge_dim, embed_dim, layer):
    keys = jax.random.split(key, 1 + 2 * layer)
    mlp_w, mlp_b = _linear_init(keys[0], node_dim, embed_dim)
    params = {
        "mlp_w": mlp_w,
        "mlp_b": mlp_b,
        "bn_gamma": jnp.ones((1, embed_dim), jnp.float32),
        "bn_beta": jnp.zeros((1, embed_dim), jnp.float32),
        "layers": [],
    }
    z_dim = 2 * embed_dim + edge_dim
    for i in range(layer):
        wf, bf = _linear_init(keys[1 + 2 * i], z_dim, embed_dim)
        ws, bs = _linear_init(keys[2 + 2 * i], z_dim, embed_dim)
        params["layers"].append({"wf": wf, "bf": bf, "ws": ws, "bs": bs})
    return params


def _pack_params(params):
    """Pad feature dim to 128 lanes, stack [wf|ws] column-wise, split the
    x_i/x_j/e row blocks, fold the bias into the edge-projection weight (as a
    last row paired with a ones-column on e), stack across layers, and cast
    MXU weights to bf16."""
    C = params["mlp_w"].shape[1]
    CP = _round_up(max(C, LANE), LANE)
    pad_c = CP - C

    def pad_cols(a):
        return jnp.pad(a, ((0, 0), (0, pad_c)))

    w0 = pad_cols(params["mlp_w"])                             # [node_dim, CP] f32
    b0 = pad_cols(params["mlp_b"])                             # [1, CP] f32
    gamma = pad_cols(params["bn_gamma"])                       # pad value irrelevant
    beta = pad_cols(params["bn_beta"])

    wi_l, wj_l, we_l = [], [], []
    for lp in params["layers"]:
        wf, ws, bf, bs = lp["wf"], lp["ws"], lp["bf"], lp["bs"]
        wf_i, wf_j, wf_e = wf[:C], wf[C:2 * C], wf[2 * C:]
        ws_i, ws_j, ws_e = ws[:C], ws[C:2 * C], ws[2 * C:]
        wi = jnp.concatenate([pad_cols(wf_i), pad_cols(ws_i)], axis=1)   # [C, 2CP]
        wj = jnp.concatenate([pad_cols(wf_j), pad_cols(ws_j)], axis=1)
        we = jnp.concatenate([pad_cols(wf_e), pad_cols(ws_e)], axis=1)   # [D, 2CP]
        b = jnp.concatenate([pad_cols(bf), pad_cols(bs)], axis=1)        # [1, 2CP]
        wi = jnp.pad(wi, ((0, pad_c), (0, 0)))                           # [CP, 2CP]
        wj = jnp.pad(wj, ((0, pad_c), (0, 0)))
        we_aug = jnp.concatenate([we, b], axis=0)                        # [D+1, 2CP]
        wi_l.append(wi)
        wj_l.append(wj)
        we_l.append(we_aug)

    wi_s = jnp.stack(wi_l).astype(jnp.bfloat16)     # [L, CP, 2CP]
    wj_s = jnp.stack(wj_l).astype(jnp.bfloat16)     # [L, CP, 2CP]
    we_s = jnp.stack(we_l).astype(jnp.bfloat16)     # [L, D+1, 2CP]
    return C, CP, (w0, b0, gamma, beta, wi_s, wj_s, we_s)


def gnn_forward(node_attr, edge_index, edge_attr, params):
    n_nodes = node_attr.shape[0]
    n_edges = edge_attr.shape[0]
    C, CP, packed = _pack_params(params)
    w0, b0, gamma, beta, wi_s, wj_s, we_s = packed

    src = edge_index[0].astype(jnp.int32).reshape(n_edges, 1)    # x_j indices
    dst = edge_index[1].astype(jnp.int32).reshape(n_edges, 1)    # x_i / aggregation
    dst_t = edge_index[1].astype(jnp.int32).reshape(1, n_edges)  # for the [N,E] one-hot
    ones = jnp.ones((n_edges, 1), jnp.float32)
    e_aug = jnp.concatenate([edge_attr, ones], axis=1).astype(jnp.bfloat16)

    vmem = pl.BlockSpec(memory_space=pltpu.MemorySpace.VMEM)
    out = pl.pallas_call(
        _gnn_fused_kernel,
        out_shape=jax.ShapeDtypeStruct((n_nodes, CP), jnp.float32),
        in_specs=[vmem] * 12,
        out_specs=vmem,
        # NOTE: everything fits far below the default scoped-VMEM limit; when
        # scaling up graphs, raise vmem_limit_bytes via pltpu.CompilerParams
        # (re-derive tile sizes for v7x's 64 MiB physical VMEM).
    )(node_attr, src, dst, dst_t, e_aug,
      w0, b0, gamma, beta, wi_s, wj_s, we_s)
    return out[:, :C]                                  # drop lane padding


# --------------------------------------------------------------------------
# Pure-JAX reference (mirrors the PyTorch module's forward, f32 throughout).
# --------------------------------------------------------------------------
def _gnn_reference(node_attr, edge_index, edge_attr, params):
    h = node_attr @ params["mlp_w"] + params["mlp_b"]
    mean = h.mean(0, keepdims=True)
    var = ((h - mean) ** 2).mean(0, keepdims=True)
    h = (h - mean) / jnp.sqrt(var + BN_EPS) * params["bn_gamma"] + params["bn_beta"]
    h = jnp.maximum(h, 0.0)
    src = edge_index[0]
    dst = edge_index[1]
    n = h.shape[0]
    for lp in params["layers"]:
        z = jnp.concatenate([h[dst], h[src], edge_attr], axis=-1)
        f = z @ lp["wf"] + lp["bf"]
        s = z @ lp["ws"] + lp["bs"]
        msg = jax.nn.sigmoid(f) * jax.nn.softplus(s)
        agg = jax.ops.segment_sum(msg, dst, num_segments=n)
        h = jnp.maximum(h + agg, 0.0)
    return h


if __name__ == "__main__":
    node_dim, edge_dim, embed_dim, n_layers = 6, 4, 32, 2
    n_nodes, n_edges = 16, 32

    key = jax.random.PRNGKey(0)
    k_node, k_edge, k_src, k_dst, k_param = jax.random.split(key, 5)

    node_attr = jax.random.normal(k_node, (n_nodes, node_dim), jnp.float32)
    edge_attr = jax.random.normal(k_edge, (n_edges, edge_dim), jnp.float32)
    edge_index = jnp.stack([
        jax.random.randint(k_src, (n_edges,), 0, n_nodes, jnp.int32),
        jax.random.randint(k_dst, (n_edges,), 0, n_nodes, jnp.int32),
    ], axis=0)                                        # [2, E]

    params = init_gnn_params(k_param, node_dim, edge_dim, embed_dim, n_layers)

    out = gnn_forward(node_attr, edge_index, edge_attr, params)
    out = jax.block_until_ready(out)
    assert out.shape == (n_nodes, embed_dim)

    # Correctness vs. f32 reference (kernel uses bf16 MXU operands with f32
    # accumulation over 2 layers -> loose absolute tolerance).
    ref = _gnn_reference(node_attr, edge_index, edge_attr, params)
    max_err = float(jnp.max(jnp.abs(out - ref)))
    assert max_err < 1.5e-1, f"max abs error {max_err}"
    print("KERNEL_OK")
</pallas_src>

<mosaic_0001>
module attributes {stable_mosaic.version = 11 : i64} {
  func.func @_gnn_fused_kernel(%arg0: memref<16x6xf32, #tpu.memory_space<vmem>>, %arg1: memref<32x1xi32, #tpu.memory_space<vmem>>, %arg2: memref<32x1xi32, #tpu.memory_space<vmem>>, %arg3: memref<1x32xi32, #tpu.memory_space<vmem>>, %arg4: memref<32x5xbf16, #tpu.memory_space<vmem>>, %arg5: memref<6x128xf32, #tpu.memory_space<vmem>>, %arg6: memref<1x128xf32, #tpu.memory_space<vmem>>, %arg7: memref<1x128xf32, #tpu.memory_space<vmem>>, %arg8: memref<1x128xf32, #tpu.memory_space<vmem>>, %arg9: memref<2x128x256xbf16, #tpu.memory_space<vmem>>, %arg10: memref<2x128x256xbf16, #tpu.memory_space<vmem>>, %arg11: memref<2x5x256xbf16, #tpu.memory_space<vmem>>, %arg12: memref<16x128xf32, #tpu.memory_space<vmem>>) attributes {dimension_semantics = [], scalar_prefetch = 0 : i64, scratch_operands = 0 : i64, tpu.core_type = #tpu.core_type<tc>} {
    %c0 = arith.constant 0 : index
    %c0_0 = arith.constant 0 : index
    %0 = vector.load %arg0[%c0, %c0_0] : memref<16x6xf32, #tpu.memory_space<vmem>>, vector<16x6xf32>
    %c0_1 = arith.constant 0 : index
    %c0_2 = arith.constant 0 : index
    %1 = vector.load %arg5[%c0_1, %c0_2] : memref<6x128xf32, #tpu.memory_space<vmem>>, vector<6x128xf32>
    %cst = arith.constant dense<0.000000e+00> : vector<16x128xf32>
    %2 = tpu.matmul %0, %1, %cst {dimension_numbers = #tpu.dot_dimension_numbers<[1], [0], [0], [1], [0, 0, 1, 1], [], []>} : vector<16x6xf32>, vector<6x128xf32>, vector<16x128xf32> -> vector<16x128xf32>
    %c0_3 = arith.constant 0 : index
    %c0_4 = arith.constant 0 : index
    %3 = vector.load %arg6[%c0_3, %c0_4] : memref<1x128xf32, #tpu.memory_space<vmem>>, vector<1x128xf32>
    %4 = vector.broadcast %3 : vector<1x128xf32> to vector<16x128xf32>
    %5 = arith.addf %2, %4 : vector<16x128xf32>
    %cst_5 = arith.constant dense<0.000000e+00> : vector<128xf32>
    %6 = vector.multi_reduction <add>, %5, %cst_5 [0] : vector<16x128xf32> to vector<128xf32>
    %7 = vector.shape_cast %6 : vector<128xf32> to vector<1x128xf32>
    %cst_6 = arith.constant 1.600000e+01 : f32
    %8 = vector.broadcast %cst_6 : f32 to vector<1x128xf32>
    %9 = arith.divf %7, %8 : vector<1x128xf32>
    %10 = vector.broadcast %9 : vector<1x128xf32> to vector<16x128xf32>
    %11 = arith.subf %5, %10 : vector<16x128xf32>
    %12 = arith.mulf %11, %11 : vector<16x128xf32>
    %cst_7 = arith.constant dense<0.000000e+00> : vector<128xf32>
    %13 = vector.multi_reduction <add>, %12, %cst_7 [0] : vector<16x128xf32> to vector<128xf32>
    %14 = vector.shape_cast %13 : vector<128xf32> to vector<1x128xf32>
    %cst_8 = arith.constant 1.600000e+01 : f32
    %15 = vector.broadcast %cst_8 : f32 to vector<1x128xf32>
    %16 = arith.divf %14, %15 : vector<1x128xf32>
    %17 = vector.broadcast %9 : vector<1x128xf32> to vector<16x128xf32>
    %18 = arith.subf %5, %17 : vector<16x128xf32>
    %cst_9 = arith.constant 9.99999974E-6 : f32
    %19 = vector.broadcast %cst_9 : f32 to vector<1x128xf32>
    %20 = arith.addf %16, %19 : vector<1x128xf32>
    %21 = math.rsqrt %20 : vector<1x128xf32>
    %22 = vector.broadcast %21 : vector<1x128xf32> to vector<16x128xf32>
    %23 = arith.mulf %18, %22 : vector<16x128xf32>
    %c0_10 = arith.constant 0 : index
    %c0_11 = arith.constant 0 : index
    %24 = vector.load %arg7[%c0_10, %c0_11] : memref<1x128xf32, #tpu.memory_space<vmem>>, vector<1x128xf32>
    %25 = vector.broadcast %24 : vector<1x128xf32> to vector<16x128xf32>
    %26 = arith.mulf %23, %25 : vector<16x128xf32>
    %c0_12 = arith.constant 0 : index
    %c0_13 = arith.constant 0 : index
    %27 = vector.load %arg8[%c0_12, %c0_13] : memref<1x128xf32, #tpu.memory_space<vmem>>, vector<1x128xf32>
    %28 = vector.broadcast %27 : vector<1x128xf32> to vector<16x128xf32>
    %29 = arith.addf %26, %28 : vector<16x128xf32>
    %cst_14 = arith.constant 0.000000e+00 : f32
    %30 = vector.broadcast %cst_14 : f32 to vector<16x128xf32>
    %31 = arith.maximumf %29, %30 : vector<16x128xf32>
    %c0_15 = arith.constant 0 : index
    %c0_16 = arith.constant 0 : index
    %32 = vector.load %arg4[%c0_15, %c0_16] : memref<32x5xbf16, #tpu.memory_space<vmem>>, vector<32x5xbf16>
    %c0_17 = arith.constant 0 : index
    %c0_18 = arith.constant 0 : index
    %33 = vector.load %arg1[%c0_17, %c0_18] : memref<32x1xi32, #tpu.memory_space<vmem>>, vector<32x1xi32>
    %c0_19 = arith.constant 0 : index
    %c0_20 = arith.constant 0 : index
    %34 = vector.load %arg2[%c0_19, %c0_20] : memref<32x1xi32, #tpu.memory_space<vmem>>, vector<32x1xi32>
    %35 = tpu.iota {dimensions = array<i32: 1>} : vector<32x32xi32>
    %36 = vector.broadcast %34 : vector<32x1xi32> to vector<32x32xi32>
    %37 = arith.cmpi eq, %35, %36 : vector<32x32xi32>
    %c16_i32 = arith.constant 16 : i32
    %38 = vector.broadcast %c16_i32 : i32 to vector<32x1xi32>
    %39 = arith.addi %33, %38 : vector<32x1xi32>
    %40 = vector.broadcast %39 : vector<32x1xi32> to vector<32x32xi32>
    %41 = arith.cmpi eq, %35, %40 : vector<32x32xi32>
    %42 = arith.ori %37, %41 : vector<32x32xi1>
    %43 = arith.extui %42 : vector<32x32xi1> to vector<32x32xi32>
    %44 = arith.sitofp %43 : vector<32x32xi32> to vector<32x32xf32>
    %45 = arith.truncf %44 : vector<32x32xf32> to vector<32x32xbf16>
    %46 = tpu.iota {dimensions = array<i32: 0>} : vector<16x32xi32>
    %c0_21 = arith.constant 0 : index
    %c0_22 = arith.constant 0 : index
    %47 = vector.load %arg3[%c0_21, %c0_22] : memref<1x32xi32, #tpu.memory_space<vmem>>, vector<1x32xi32>
    %48 = vector.broadcast %47 : vector<1x32xi32> to vector<16x32xi32>
    %49 = arith.cmpi eq, %48, %46 : vector<16x32xi32>
    %50 = arith.extui %49 : vector<16x32xi1> to vector<16x32xi32>
    %51 = arith.sitofp %50 : vector<16x32xi32> to vector<16x32xf32>
    %52 = arith.truncf %51 : vector<16x32xf32> to vector<16x32xbf16>
    %53 = arith.truncf %31 : vector<16x128xf32> to vector<16x128xbf16>
    %c0_23 = arith.constant 0 : index
    %c0_24 = arith.constant 0 : index
    %c0_25 = arith.constant 0 : index
    %54 = vector.load %arg9[%c0_23, %c0_24, %c0_25] : memref<2x128x256xbf16, #tpu.memory_space<vmem>>, vector<1x128x256xbf16>
    %55 = vector.shape_cast %54 : vector<1x128x256xbf16> to vector<128x256xbf16>
    %cst_26 = arith.constant dense<0.000000e+00> : vector<16x256xf32>
    %56 = tpu.matmul %53, %55, %cst_26 {dimension_numbers = #tpu.dot_dimension_numbers<[1], [0], [0], [1], [0, 0, 1, 1], [], []>} : vector<16x128xbf16>, vector<128x256xbf16>, vector<16x256xf32> -> vector<16x256xf32>
    %c0_27 = arith.constant 0 : index
    %c0_28 = arith.constant 0 : index
    %c0_29 = arith.constant 0 : index
    %57 = vector.load %arg10[%c0_27, %c0_28, %c0_29] : memref<2x128x256xbf16, #tpu.memory_space<vmem>>, vector<1x128x256xbf16>
    %58 = vector.shape_cast %57 : vector<1x128x256xbf16> to vector<128x256xbf16>
    %cst_30 = arith.constant dense<0.000000e+00> : vector<16x256xf32>
    %59 = tpu.matmul %53, %58, %cst_30 {dimension_numbers = #tpu.dot_dimension_numbers<[1], [0], [0], [1], [0, 0, 1, 1], [], []>} : vector<16x128xbf16>, vector<128x256xbf16>, vector<16x256xf32> -> vector<16x256xf32>
    %c0_31 = arith.constant 0 : index
    %c0_32 = arith.constant 0 : index
    %c0_33 = arith.constant 0 : index
    %60 = vector.load %arg11[%c0_31, %c0_32, %c0_33] : memref<2x5x256xbf16, #tpu.memory_space<vmem>>, vector<1x5x256xbf16>
    %61 = vector.shape_cast %60 : vector<1x5x256xbf16> to vector<5x256xbf16>
    %cst_34 = arith.constant dense<0.000000e+00> : vector<32x256xf32>
    %62 = tpu.matmul %32, %61, %cst_34 {dimension_numbers = #tpu.dot_dimension_numbers<[1], [0], [0], [1], [0, 0, 1, 1], [], []>} : vector<32x5xbf16>, vector<5x256xbf16>, vector<32x256xf32> -> vector<32x256xf32>
    %63 = tpu.concatenate %56, %59 in 0 : vector<16x256xf32>, vector<16x256xf32> -> vector<32x256xf32>
    %64 = arith.truncf %63 : vector<32x256xf32> to vector<32x256xbf16>
    %cst_35 = arith.constant dense<0.000000e+00> : vector<32x256xf32>
    %65 = tpu.matmul %45, %64, %cst_35 {dimension_numbers = #tpu.dot_dimension_numbers<[1], [0], [0], [1], [0, 0, 1, 1], [], []>} : vector<32x32xbf16>, vector<32x256xbf16>, vector<32x256xf32> -> vector<32x256xf32>
    %66 = arith.addf %65, %62 : vector<32x256xf32>
    %67 = vector.extract_strided_slice %66 {offsets = [0, 0], sizes = [32, 128], strides = [1, 1]} : vector<32x256xf32> to vector<32x128xf32>
    %68 = vector.extract_strided_slice %66 {offsets = [0, 128], sizes = [32, 128], strides = [1, 1]} : vector<32x256xf32> to vector<32x128xf32>
    %69 = arith.negf %67 : vector<32x128xf32>
    %70 = math.exp %69 : vector<32x128xf32>
    %cst_36 = arith.constant 1.000000e+00 : f32
    %71 = vector.broadcast %cst_36 : f32 to vector<32x128xf32>
    %72 = arith.addf %71, %70 : vector<32x128xf32>
    %73 = arith.divf %71, %72 : vector<32x128xf32>
    %cst_37 = arith.constant 0.000000e+00 : f32
    %74 = vector.broadcast %cst_37 : f32 to vector<32x128xf32>
    %75 = arith.maximumf %68, %74 : vector<32x128xf32>
    %76 = math.absf %68 : vector<32x128xf32>
    %cst_38 = arith.constant 0.000000e+00 : f32
    %77 = vector.broadcast %cst_38 : f32 to vector<32x128xf32>
    %78 = arith.subf %77, %76 : vector<32x128xf32>
    %79 = math.exp %78 : vector<32x128xf32>
    %80 = math.log1p %79 : vector<32x128xf32>
    %81 = arith.addf %75, %80 : vector<32x128xf32>
    %82 = arith.mulf %73, %81 : vector<32x128xf32>
    %83 = arith.truncf %82 : vector<32x128xf32> to vector<32x128xbf16>
    %cst_39 = arith.constant dense<0.000000e+00> : vector<16x128xf32>
    %84 = tpu.matmul %52, %83, %cst_39 {dimension_numbers = #tpu.dot_dimension_numbers<[1], [0], [0], [1], [0, 0, 1, 1], [], []>} : vector<16x32xbf16>, vector<32x128xbf16>, vector<16x128xf32> -> vector<16x128xf32>
    %85 = arith.addf %31, %84 : vector<16x128xf32>
    %cst_40 = arith.constant 0.000000e+00 : f32
    %86 = vector.broadcast %cst_40 : f32 to vector<16x128xf32>
    %87 = arith.maximumf %85, %86 : vector<16x128xf32>
    %88 = arith.truncf %87 : vector<16x128xf32> to vector<16x128xbf16>
    %c1 = arith.constant 1 : index
    %c0_41 = arith.constant 0 : index
    %c0_42 = arith.constant 0 : index
    %89 = vector.load %arg9[%c1, %c0_41, %c0_42] : memref<2x128x256xbf16, #tpu.memory_space<vmem>>, vector<1x128x256xbf16>
    %90 = vector.shape_cast %89 : vector<1x128x256xbf16> to vector<128x256xbf16>
    %cst_43 = arith.constant dense<0.000000e+00> : vector<16x256xf32>
    %91 = tpu.matmul %88, %90, %cst_43 {dimension_numbers = #tpu.dot_dimension_numbers<[1], [0], [0], [1], [0, 0, 1, 1], [], []>} : vector<16x128xbf16>, vector<128x256xbf16>, vector<16x256xf32> -> vector<16x256xf32>
    %c1_44 = arith.constant 1 : index
    %c0_45 = arith.constant 0 : index
    %c0_46 = arith.constant 0 : index
    %92 = vector.load %arg10[%c1_44, %c0_45, %c0_46] : memref<2x128x256xbf16, #tpu.memory_space<vmem>>, vector<1x128x256xbf16>
    %93 = vector.shape_cast %92 : vector<1x128x256xbf16> to vector<128x256xbf16>
    %cst_47 = arith.constant dense<0.000000e+00> : vector<16x256xf32>
    %94 = tpu.matmul %88, %93, %cst_47 {dimension_numbers = #tpu.dot_dimension_numbers<[1], [0], [0], [1], [0, 0, 1, 1], [], []>} : vector<16x128xbf16>, vector<128x256xbf16>, vector<16x256xf32> -> vector<16x256xf32>
    %c1_48 = arith.constant 1 : index
    %c0_49 = arith.constant 0 : index
    %c0_50 = arith.constant 0 : index
    %95 = vector.load %arg11[%c1_48, %c0_49, %c0_50] : memref<2x5x256xbf16, #tpu.memory_space<vmem>>, vector<1x5x256xbf16>
    %96 = vector.shape_cast %95 : vector<1x5x256xbf16> to vector<5x256xbf16>
    %cst_51 = arith.constant dense<0.000000e+00> : vector<32x256xf32>
    %97 = tpu.matmul %32, %96, %cst_51 {dimension_numbers = #tpu.dot_dimension_numbers<[1], [0], [0], [1], [0, 0, 1, 1], [], []>} : vector<32x5xbf16>, vector<5x256xbf16>, vector<32x256xf32> -> vector<32x256xf32>
    %98 = tpu.concatenate %91, %94 in 0 : vector<16x256xf32>, vector<16x256xf32> -> vector<32x256xf32>
    %99 = arith.truncf %98 : vector<32x256xf32> to vector<32x256xbf16>
    %cst_52 = arith.constant dense<0.000000e+00> : vector<32x256xf32>
    %100 = tpu.matmul %45, %99, %cst_52 {dimension_numbers = #tpu.dot_dimension_numbers<[1], [0], [0], [1], [0, 0, 1, 1], [], []>} : vector<32x32xbf16>, vector<32x256xbf16>, vector<32x256xf32> -> vector<32x256xf32>
    %101 = arith.addf %100, %97 : vector<32x256xf32>
    %102 = vector.extract_strided_slice %101 {offsets = [0, 0], sizes = [32, 128], strides = [1, 1]} : vector<32x256xf32> to vector<32x128xf32>
    %103 = vector.extract_strided_slice %101 {offsets = [0, 128], sizes = [32, 128], strides = [1, 1]} : vector<32x256xf32> to vector<32x128xf32>
    %104 = arith.negf %102 : vector<32x128xf32>
    %105 = math.exp %104 : vector<32x128xf32>
    %cst_53 = arith.constant 1.000000e+00 : f32
    %106 = vector.broadcast %cst_53 : f32 to vector<32x128xf32>
    %107 = arith.addf %106, %105 : vector<32x128xf32>
    %108 = arith.divf %106, %107 : vector<32x128xf32>
    %cst_54 = arith.constant 0.000000e+00 : f32
    %109 = vector.broadcast %cst_54 : f32 to vector<32x128xf32>
    %110 = arith.maximumf %103, %109 : vector<32x128xf32>
    %111 = math.absf %103 : vector<32x128xf32>
    %cst_55 = arith.constant 0.000000e+00 : f32
    %112 = vector.broadcast %cst_55 : f32 to vector<32x128xf32>
    %113 = arith.subf %112, %111 : vector<32x128xf32>
    %114 = math.exp %113 : vector<32x128xf32>
    %115 = math.log1p %114 : vector<32x128xf32>
    %116 = arith.addf %110, %115 : vector<32x128xf32>
    %117 = arith.mulf %108, %116 : vector<32x128xf32>
    %118 = arith.truncf %117 : vector<32x128xf32> to vector<32x128xbf16>
    %cst_56 = arith.constant dense<0.000000e+00> : vector<16x128xf32>
    %119 = tpu.matmul %52, %118, %cst_56 {dimension_numbers = #tpu.dot_dimension_numbers<[1], [0], [0], [1], [0, 0, 1, 1], [], []>} : vector<16x32xbf16>, vector<32x128xbf16>, vector<16x128xf32> -> vector<16x128xf32>
    %120 = arith.addf %87, %119 : vector<16x128xf32>
    %cst_57 = arith.constant 0.000000e+00 : f32
    %121 = vector.broadcast %cst_57 : f32 to vector<16x128xf32>
    %122 = arith.maximumf %120, %121 : vector<16x128xf32>
    %c0_58 = arith.constant 0 : index
    %c0_59 = arith.constant 0 : index
    %123 = vector.load %arg12[%c0_58, %c0_59] : memref<16x128xf32, #tpu.memory_space<vmem>>, vector<16x128xf32>
    tpu.vector_store %arg12[%c0_58, %c0_59], %122 {strides = array<i32>} : memref<16x128xf32, #tpu.memory_space<vmem>>, vector<16x128xf32>,
    return
  }
}

</mosaic_0001>

<llo_original>
// kernel: tpu_custom_call.1
$region0: #{tpu_custom_call.1}
  #allocation0 [shape = 'u32[]', space=smem, size = 0x4, offset = 0x4, fixed_abs, tag = 'smem constant byte address 0x4 - core index']
  #allocation1 [shape = 'u32[144,128]{1,0:T(1,128)}', space=vmem, size = 0x12000, scoped, tag = 'internal scratch']
  %s0 = inlined_call_operand.vmem [shape: f32[16,6], index: 0, kind: input, shape index: {}]
  %s1 = inlined_call_operand.vmem [shape: s32[32,1], index: 1, kind: input, shape index: {}]
  %s2 = inlined_call_operand.vmem [shape: s32[32,1], index: 2, kind: input, shape index: {}]
  %s3 = inlined_call_operand.vmem [shape: s32[1,32], index: 3, kind: input, shape index: {}]
  %s4 = inlined_call_operand.vmem [shape: bf16[32,5], index: 4, kind: input, shape index: {}]
  %s5 = inlined_call_operand.vmem [shape: f32[6,128], index: 5, kind: input, shape index: {}]
  %s6 = inlined_call_operand.vmem [shape: f32[1,128], index: 6, kind: input, shape index: {}]
  %s7 = inlined_call_operand.vmem [shape: f32[1,128], index: 7, kind: input, shape index: {}]
  %s8 = inlined_call_operand.vmem [shape: f32[1,128], index: 8, kind: input, shape index: {}]
  %s9 = inlined_call_operand.hbm [shape: bf16[2,128,256], index: 9, kind: input, shape index: {}]
  %s10 = inlined_call_operand.hbm [shape: bf16[2,128,256], index: 10, kind: input, shape index: {}]
  %s11 = inlined_call_operand.vmem [shape: bf16[2,5,256], index: 11, kind: input, shape index: {}]
  %s12 = inlined_call_operand.hbm [shape: f32[16,128], index: 12, kind: output, shape index: {}]
  %s13 = sld [smem:[#allocation0]]
  $region66: #{tpu_custom_call.1} parent=0
    _
  %s15 = ssub.s32 1, %s13
  %s16 = scalar_select 0, %s15, %s13
  $region1: #{tpu_custom_call.1} parent=0
    #allocation2 [shape = 'u8[131072]{0}', space=vmem, size = 0x20000, scoped, tag = 'input window, operand 9, single buffered']
    #allocation3 [shape = 's32[1]{0}', space=sflag, size = 0x4, scoped, tag = 'scoped memory for tpu_custom_call.1']
    #allocation4 [shape = 's32[1]{0}', space=sflag, size = 0x4, scoped, tag = 'scoped memory for tpu_custom_call.1']
    #allocation5 [shape = 'u8[131072]{0}', space=vmem, size = 0x20000, scoped, tag = 'input window, operand 10, single buffered']
    #allocation6 [shape = 's32[1]{0}', space=sflag, size = 0x4, scoped, tag = 'scoped memory for tpu_custom_call.1']
    #allocation7 [shape = 'u8[8192]{0}', space=vmem, size = 0x2000, scoped, tag = 'output window, operand 0, single buffered']
    %17 = vsyncpa [#allocation3], 0
    %18 = vsyncpa [#allocation6], 0
    %19 = vsyncpa [#allocation4], 0
    // Predicated region
    $region2: #{tpu_custom_call.1} parent=1 // pred_check
      _
    $region3: #{tpu_custom_call.1} parent=1 // pred_check_branch
      %21 = sbr.rel (0) target = $region5
    $region4: #{tpu_custom_call.1} parent=1 // pred_region
      _
    $region5: #{tpu_custom_call.1} parent=1 // pred_fallthru
      _
    // Predicated region
    $region6: #{tpu_custom_call.1} parent=1 // pred_check
      _
    $region7: #{tpu_custom_call.1} parent=1 // pred_check_branch
      %23 = sbr.rel (0) target = $region9
    $region8: #{tpu_custom_call.1} parent=1 // pred_region
      _
    $region9: #{tpu_custom_call.1} parent=1 // pred_fallthru
      _
    // Predicated region
    $region10: #{tpu_custom_call.1} parent=1 // pred_check
      _
    $region11: #{tpu_custom_call.1} parent=1 // pred_check_branch
      %25 = sbr.rel (0) target = $region13
    $region12: #{tpu_custom_call.1} parent=1 // pred_region
      _
    $region13: #{tpu_custom_call.1} parent=1 // pred_fallthru
      _
    // Predicated region
    $region14: #{tpu_custom_call.1} parent=1 // pred_check
      _
    $region15: #{tpu_custom_call.1} parent=1 // pred_check_branch
      %27 = sbr.rel (0) target = $region17
    $region16: #{tpu_custom_call.1} parent=1 // pred_region
      _
    $region17: #{tpu_custom_call.1} parent=1 // pred_fallthru
      _
    // Predicated region
    $region18: #{tpu_custom_call.1} parent=1 // pred_check
      _
    $region19: #{tpu_custom_call.1} parent=1 // pred_check_branch
      %29 = sbr.rel (0) target = $region21
    $region20: #{tpu_custom_call.1} parent=1 // pred_region
      _
    $region21: #{tpu_custom_call.1} parent=1 // pred_fallthru
      _
    // Predicated region
    $region22: #{tpu_custom_call.1} parent=1 // pred_check
      _
    $region23: #{tpu_custom_call.1} parent=1 // pred_check_branch
      %31 = sbr.rel (0) target = $region25
    $region24: #{tpu_custom_call.1} parent=1 // pred_region
      _
    $region25: #{tpu_custom_call.1} parent=1 // pred_fallthru
      _
    // Predicated region
    $region26: #{tpu_custom_call.1} parent=1 // pred_check
      _
    $region27: #{tpu_custom_call.1} parent=1 // pred_check_branch
      %33 = sbr.rel (0) target = $region29
    $region28: #{tpu_custom_call.1} parent=1 // pred_region
      _
    $region29: #{tpu_custom_call.1} parent=1 // pred_fallthru
      _
    // Predicated region
    $region30: #{tpu_custom_call.1} parent=1 // pred_check
      _
    $region31: #{tpu_custom_call.1} parent=1 // pred_check_branch
      %35 = sbr.rel (0) target = $region33
    $region32: #{tpu_custom_call.1} parent=1 // pred_region
      _
    $region33: #{tpu_custom_call.1} parent=1 // pred_fallthru
      _
    // Predicated region
    $region34: #{tpu_custom_call.1} parent=1 // pred_check
      _
    $region35: #{tpu_custom_call.1} parent=1 // pred_check_branch
      %37 = sbr.rel (0) target = $region37
    $region36: #{tpu_custom_call.1} parent=1 // pred_region
      _
    $region37: #{tpu_custom_call.1} parent=1 // pred_fallthru
      _
    // Predicated region
    $region38: #{tpu_custom_call.1} parent=1 // pred_check
      _
    $region39: #{tpu_custom_call.1} parent=1 // pred_check_branch
      %39 = sbr.rel (0) target = $region41
    $region40: #{tpu_custom_call.1} parent=1 // pred_region
      %s41 = ssub.s32 4096, 4096
      %42 = vsyncadd [#allocation3], %s41
      %s43 = sshll.u32 [#allocation2], 4
      %s44 = int_to_ptr.vmem [resolvable:$true] %s43
      %49 = dma.hbm_to_vmem [thread:$0]  %s9, 4096, %s44, [#allocation3], 128, 128, 8
    $region41: #{tpu_custom_call.1} parent=1 // pred_fallthru
      _
    // Predicated region
    $region42: #{tpu_custom_call.1} parent=1 // pred_check
      _
    $region43: #{tpu_custom_call.1} parent=1 // pred_check_branch
      %51 = sbr.rel (0) target = $region45
    $region44: #{tpu_custom_call.1} parent=1 // pred_region
      %s53 = ssub.s32 4096, 4096
      %54 = vsyncadd [#allocation6], %s53
      %s55 = sshll.u32 [#allocation5], 4
      %s56 = int_to_ptr.vmem [resolvable:$true] %s55
      %61 = dma.hbm_to_vmem [thread:$0]  %s10, 4096, %s56, [#allocation6], 128, 128, 8
    $region45: #{tpu_custom_call.1} parent=1 // pred_fallthru
      _
    // Predicated region
    $region46: #{tpu_custom_call.1} parent=1 // pred_check
      _
    $region47: #{tpu_custom_call.1} parent=1 // pred_check_branch
      %63 = sbr.rel (0) target = $region49
    $region48: #{tpu_custom_call.1} parent=1 // pred_region
      _
    $region49: #{tpu_custom_call.1} parent=1 // pred_fallthru
      _
    // Predicated region
    $region50: #{tpu_custom_call.1} parent=1 // pred_check
      _
    $region51: #{tpu_custom_call.1} parent=1 // pred_check_branch
      %65 = sbr.rel (0) target = $region53
    $region52: #{tpu_custom_call.1} parent=1 // pred_region
      %66 = dma.done [#allocation3], 4096
    $region53: #{tpu_custom_call.1} parent=1 // pred_fallthru
      _
    // Predicated region
    $region54: #{tpu_custom_call.1} parent=1 // pred_check
      _
    $region55: #{tpu_custom_call.1} parent=1 // pred_check_branch
      %68 = sbr.rel (0) target = $region57
    $region56: #{tpu_custom_call.1} parent=1 // pred_region
      %69 = dma.done [#allocation6], 4096
    $region57: #{tpu_custom_call.1} parent=1 // pred_fallthru
      _
    %v71 = vld [vmem:[%s0] sm:$0xff]
    %v72 = vld [vmem:[%s0 + $0x8] sm:$0xff]
    %v73 = vld [vmem:[%s5] sm:$0x3f]
    %v74 = vld [vmem:[%s6] sm:$0x1]
    %v76 = vlaneseq
    %v77 = vshrl.u32 %v76, 7
    %v78 = vsub.s32 0, %v77
    %v79 = vrot.slane %v74, %v78
    %vm81 = vcmask 48128
    %v83 = vsel %vm81, %v71, 0
    %v86 = vsel %vm81, %v72, 0
    %vm88 = vcmask 1045504
    %v90 = vsel %vm88, %v73, 0
    %92 = vmatprep.subr.mxu0 0.0
    %93 = vmatpush1.msra.mxu0 0.0
    %94 = vmatprep.subr.mxu0 0.0
    %95 = vmatpush1.msra.mxu0 0.0
    %96 = vmatprep.subr.mxu0 0.0
    %97 = vmatpush1.msra.mxu0 0.0
    %98 = vmatprep.subr.mxu0 0.0
    %99 = vmatpush1.msra.mxu0 0.0
    %100 = vmatprep.subr.mxu0 0.0
    %101 = vmatpush1.msra.mxu0 0.0
    %102 = vmatprep.subr.mxu0 0.0
    %103 = vmatpush1.msra.mxu0 0.0
    %104 = vmatprep.subr.mxu0 0.0
    %105 = vmatpush1.msra.mxu0 0.0
    %106 = vmatprep.subr.mxu0 0.0
    %107 = vmatpush1.msra.mxu0 0.0
    %108 = vmatprep.subr.mxu0 0.0
    %109 = vmatpush1.msra.mxu0 0.0
    %110 = vmatprep.subr.mxu0 0.0
    %111 = vmatpush1.msra.mxu0 0.0
    %112 = vmatprep.subr.mxu0 0.0
    %113 = vmatpush1.msra.mxu0 0.0
    %114 = vmatprep.subr.mxu0 0.0
    %115 = vmatpush1.msra.mxu0 0.0
    %116 = vmatprep.subr.mxu0 0.0
    %117 = vmatpush1.msra.mxu0 0.0
    %118 = vmatprep.subr.mxu0 0.0
    %119 = vmatpush1.msra.mxu0 0.0
    %120 = vmatprep.subr.mxu0 0.0
    %121 = vmatpush1.msra.mxu0 0.0
    %122 = vmatprep.subr.mxu0 0.0
    %123 = vmatpush1.msra.mxu0 %v90
    %124 = vmatprep.subr.mxu0 0.0
    %125 = vmatpush2.msra.mxu0 0.0
    %126 = vmatprep.subr.mxu0 0.0
    %127 = vmatpush2.msra.mxu0 0.0
    %128 = vmatprep.subr.mxu0 0.0
    %129 = vmatpush2.msra.mxu0 0.0
    %130 = vmatprep.subr.mxu0 0.0
    %131 = vmatpush2.msra.mxu0 0.0
    %132 = vmatprep.subr.mxu0 0.0
    %133 = vmatpush2.msra.mxu0 0.0
    %134 = vmatprep.subr.mxu0 0.0
    %135 = vmatpush2.msra.mxu0 0.0
    %136 = vmatprep.subr.mxu0 0.0
    %137 = vmatpush2.msra.mxu0 0.0
    %138 = vmatprep.subr.mxu0 0.0
    %139 = vmatpush2.msra.mxu0 0.0
    %140 = vmatprep.subr.mxu0 0.0
    %141 = vmatpush2.msra.mxu0 0.0
    %142 = vmatprep.subr.mxu0 0.0
    %143 = vmatpush2.msra.mxu0 0.0
    %144 = vmatprep.subr.mxu0 0.0
    %145 = vmatpush2.msra.mxu0 0.0
    %146 = vmatprep.subr.mxu0 0.0
    %147 = vmatpush2.msra.mxu0 0.0
    %148 = vmatprep.subr.mxu0 0.0
    %149 = vmatpush2.msra.mxu0 0.0
    %150 = vmatprep.subr.mxu0 0.0
    %151 = vmatpush2.msra.mxu0 0.0
    %152 = vmatprep.subr.mxu0 0.0
    %153 = vmatpush2.msra.mxu0 0.0
    %154 = vmatprep.subr.mxu0 0.0
    %155 = vmatpush2.msra.mxu0 0.0
    %156 = vmatprep.mubr.f32.mxu0 0.0
    %157 = vmatmul.mubr.f32.gmra.mxu0 %v83
    %v158 = vpop.f32.mrf.mxu0
    %v159 = vadd.f32 %v79, %v158
    %v160 = vpop.f32.mrf.mxu0
    %161 = vmatprep.mubr.f32.mxu0 0.0
    %162 = vmatmul.mubr.f32.gmra.mxu0 %v86
    %v163 = vpop.f32.mrf.mxu0
    %v164 = vadd.f32 %v79, %v163
    %v165 = vpop.f32.mrf.mxu0
    %166 = vdwg.mxu0
    %v167 = vadd.f32 %v159, %v164
    %v168 = vrot.slane %v167, 4
    %v169 = vadd.f32 %v167, %v168
    %v170 = vrot.slane %v169, 2
    %v171 = vadd.f32 %v169, %v170
    %v172 = vrot.slane %v171, 1
    %v173 = vadd.f32 %v171, %v172
    %v174 = vrcp.pop 16.0
    %v175 = vmul.f32 %v173, %v174
    %v176 = vsub.f32 %v159, %v175
    %v177 = vsub.f32 %v164, %v175
    %v178 = vmul.f32 %v176, %v176
    %v179 = vmul.f32 %v177, %v177
    %v180 = vadd.f32 %v178, %v179
    %v181 = vrot.slane %v180, 4
    %v182 = vadd.f32 %v180, %v181
    %v183 = vrot.slane %v182, 2
    %v184 = vadd.f32 %v182, %v183
    %v185 = vrot.slane %v184, 1
    %v186 = vadd.f32 %v184, %v185
    %v187 = vmul.f32 %v186, %v174
    %v188 = vadd.f32 %v187, 1e-05
    %v189 = vrsqrt.pop %v188
    %v190 = vmul.f32 %v176, %v189
    %v191 = vmul.f32 %v177, %v189
    %v192 = vld [vmem:[%s7] sm:$0x1]
    %v194 = vlaneseq
    %v195 = vshrl.u32 %v194, 7
    %v196 = vsub.s32 0, %v195
    %v197 = vrot.slane %v192, %v196
    %v199 = vmul.f32 %v190, %v197
    %v200 = vmul.f32 %v191, %v197
    %v201 = vld [vmem:[%s8] sm:$0x1]
    %v203 = vlaneseq
    %v204 = vshrl.u32 %v203, 7
    %v205 = vsub.s32 0, %v204
    %v206 = vrot.slane %v201, %v205
    %v208 = vadd.f32 %v199, %v206
    %v209 = vadd.f32 %v200, %v206
    %v210 = vmax.f32 %v208, 0.0
    %v211 = vmax.f32 %v209, 0.0
    %v212 = vld [vmem:[%s4] sm:$0xf]
    %v213 = vld [vmem:[%s4 + $0x4] sm:$0xf]
    %v214 = vld [vmem:[%s4 + $0x8] sm:$0xf]
    %v215 = vld [vmem:[%s4 + $0xc] sm:$0xf]
    %v216 = vld [vmem:[%s1] sm:$0xff]
    %v217 = vld [vmem:[%s1 + $0x8] sm:$0xff]
    %v218 = vld [vmem:[%s1 + $0x10] sm:$0xff]
    %v219 = vld [vmem:[%s1 + $0x18] sm:$0xff]
    %v220 = vld [vmem:[%s2] sm:$0xff]
    %v221 = vld [vmem:[%s2 + $0x8] sm:$0xff]
    %v222 = vld [vmem:[%s2 + $0x10] sm:$0xff]
    %v223 = vld [vmem:[%s2 + $0x18] sm:$0xff]
    %v224 = vlaneseq
    %v225 = vand.u32 %v224, 127
    %226 = vset.pattern.permute.xlu0 0
    %227 = vperm.xlu0 %226, %v220
    %v228 = vpop.permute.xlu0 %227
    %229 = vset.pattern.permute.xlu0 0
    %230 = vperm.xlu0 %229, %v221
    %v231 = vpop.permute.xlu0 %230
    %232 = vset.pattern.permute.xlu0 0
    %233 = vperm.xlu0 %232, %v222
    %v234 = vpop.permute.xlu0 %233
    %235 = vset.pattern.permute.xlu0 0
    %236 = vperm.xlu0 %235, %v223
    %v237 = vpop.permute.xlu0 %236
    %vm238 = vcmp.eq.s32.totalorder %v225, %v228
    %vm239 = vcmp.eq.s32.totalorder %v225, %v231
    %vm240 = vcmp.eq.s32.totalorder %v225, %v234
    %vm241 = vcmp.eq.s32.totalorder %v225, %v237
    %v242 = vadd.s32 %v216, 16
    %v243 = vadd.s32 %v217, 16
    %v244 = vadd.s32 %v218, 16
    %v245 = vadd.s32 %v219, 16
    %246 = vset.pattern.permute.xlu0 0
    %247 = vperm.xlu0 %246, %v242
    %v248 = vpop.permute.xlu0 %247
    %249 = vset.pattern.permute.xlu0 0
    %250 = vperm.xlu0 %249, %v243
    %v251 = vpop.permute.xlu0 %250
    %252 = vset.pattern.permute.xlu0 0
    %253 = vperm.xlu0 %252, %v244
    %v254 = vpop.permute.xlu0 %253
    %255 = vset.pattern.permute.xlu0 0
    %256 = vperm.xlu0 %255, %v245
    %v257 = vpop.permute.xlu0 %256
    %vm258 = vcmp.eq.s32.totalorder %v225, %v248
    %vm259 = vcmp.eq.s32.totalorder %v225, %v251
    %vm260 = vcmp.eq.s32.totalorder %v225, %v254
    %vm261 = vcmp.eq.s32.totalorder %v225, %v257
    %vm262 = vmor %vm238, %vm258
    %vm263 = vmor %vm239, %vm259
    %vm264 = vmor %vm240, %vm260
    %vm265 = vmor %vm241, %vm261
    %v266 = vsel %vm262, 1, 0
    %v267 = vsel %vm263, 1, 0
    %v268 = vsel %vm264, 1, 0
    %v269 = vsel %vm265, 1, 0
    %v270 = vcvt.s32.f32 %v266
    %v271 = vcvt.s32.f32 %v267
    %v272 = vcvt.s32.f32 %v268
    %v273 = vcvt.s32.f32 %v269
    %v274 = vpack.c.bf16 %v271, %v270
    %v275 = vpack.c.bf16 %v273, %v272
    %v276 = vlaneseq
    %v277 = vshrl.u32 %v276, 7
    %v278 = vadd.s32 %v277, 8
    %v279 = vld [vmem:[%s3] sm:$0x1]
    %v280 = vlaneseq
    %v281 = vshrl.u32 %v280, 7
    %v282 = vsub.s32 0, %v281
    %v283 = vrot.slane %v279, %v282
    %vm284 = vcmp.eq.s32.totalorder %v283, %v277
    %vm285 = vcmp.eq.s32.totalorder %v283, %v278
    %v286 = vsel %vm284, 1, 0
    %v287 = vsel %vm285, 1, 0
    %v288 = vcvt.s32.f32 %v286
    %v289 = vcvt.s32.f32 %v287
    %v290 = vpack.c.bf16 %v289, %v288
    %v291 = vpack.c.bf16 %v211, %v210
    %v292 = vld [vmem:[#allocation2] sm:$0xff]
    %v293 = vld [vmem:[#allocation2 + $0x8] sm:$0xff]
    %v294 = vld [vmem:[#allocation2 + $0x10] sm:$0xff]
    %v295 = vld [vmem:[#allocation2 + $0x18] sm:$0xff]
    %v296 = vld [vmem:[#allocation2 + $0x20] sm:$0xff]
    %v297 = vld [vmem:[#allocation2 + $0x28] sm:$0xff]
    %v298 = vld [vmem:[#allocation2 + $0x30] sm:$0xff]
    %v299 = vld [vmem:[#allocation2 + $0x38] sm:$0xff]
    %v300 = vld [vmem:[#allocation2 + $0x40] sm:$0xff]
    %v301 = vld [vmem:[#allocation2 + $0x48] sm:$0xff]
    %v302 = vld [vmem:[#allocation2 + $0x50] sm:$0xff]
    %v303 = vld [vmem:[#allocation2 + $0x58] sm:$0xff]
    %v304 = vld [vmem:[#allocation2 + $0x60] sm:$0xff]
    %v305 = vld [vmem:[#allocation2 + $0x68] sm:$0xff]
    %v306 = vld [vmem:[#allocation2 + $0x70] sm:$0xff]
    %v307 = vld [vmem:[#allocation2 + $0x78] sm:$0xff]
    %v324 = vunpack.c.l.b16 %v292
    %v325 = vunpack.c.h.b16 %v292
    %v326 = vunpack.c.l.b16 %v293
    %v327 = vunpack.c.h.b16 %v293
    %v328 = vunpack.c.l.b16 %v294
    %v329 = vunpack.c.h.b16 %v294
    %v330 = vunpack.c.l.b16 %v295
    %v331 = vunpack.c.h.b16 %v295
    %v332 = vunpack.c.l.b16 %v296
    %v333 = vunpack.c.h.b16 %v296
    %v334 = vunpack.c.l.b16 %v297
    %v335 = vunpack.c.h.b16 %v297
    %v336 = vunpack.c.l.b16 %v298
    %v337 = vunpack.c.h.b16 %v298
    %v338 = vunpack.c.l.b16 %v299
    %v339 = vunpack.c.h.b16 %v299
    %v340 = vunpack.c.l.b16 %v300
    %v341 = vunpack.c.h.b16 %v300
    %v342 = vunpack.c.l.b16 %v301
    %v343 = vunpack.c.h.b16 %v301
    %v344 = vunpack.c.l.b16 %v302
    %v345 = vunpack.c.h.b16 %v302
    %v346 = vunpack.c.l.b16 %v303
    %v347 = vunpack.c.h.b16 %v303
    %v348 = vunpack.c.l.b16 %v304
    %v349 = vunpack.c.h.b16 %v304
    %v350 = vunpack.c.l.b16 %v305
    %v351 = vunpack.c.h.b16 %v305
    %v352 = vunpack.c.l.b16 %v306
    %v353 = vunpack.c.h.b16 %v306
    %v354 = vunpack.c.l.b16 %v307
    %v355 = vunpack.c.h.b16 %v307
    %v356 = vpack.c.b16 %v326, %v324
    %v357 = vpack.c.b16 %v327, %v325
    %v358 = vpack.c.b16 %v330, %v328
    %v359 = vpack.c.b16 %v331, %v329
    %v360 = vpack.c.b16 %v334, %v332
    %v361 = vpack.c.b16 %v335, %v333
    %v362 = vpack.c.b16 %v338, %v336
    %v363 = vpack.c.b16 %v339, %v337
    %v364 = vpack.c.b16 %v342, %v340
    %v365 = vpack.c.b16 %v343, %v341
    %v366 = vpack.c.b16 %v346, %v344
    %v367 = vpack.c.b16 %v347, %v345
    %v368 = vpack.c.b16 %v350, %v348
    %v369 = vpack.c.b16 %v351, %v349
    %v370 = vpack.c.b16 %v354, %v352
    %v371 = vpack.c.b16 %v355, %v353
    %388 = vmatprep.subr.bf16.mxu0 %v371
    %389 = vmatpush1.bf16.msra.mxu0 %v370
    %390 = vmatprep.subr.bf16.mxu0 %v369
    %391 = vmatpush1.bf16.msra.mxu0 %v368
    %392 = vmatprep.subr.bf16.mxu0 %v367
    %393 = vmatpush1.bf16.msra.mxu0 %v366
    %394 = vmatprep.subr.bf16.mxu0 %v365
    %395 = vmatpush1.bf16.msra.mxu0 %v364
    %396 = vmatprep.subr.bf16.mxu0 %v363
    %397 = vmatpush1.bf16.msra.mxu0 %v362
    %398 = vmatprep.subr.bf16.mxu0 %v361
    %399 = vmatpush1.bf16.msra.mxu0 %v360
    %400 = vmatprep.subr.bf16.mxu0 %v359
    %401 = vmatpush1.bf16.msra.mxu0 %v358
    %402 = vmatprep.subr.bf16.mxu0 %v357
    %403 = vmatpush1.bf16.msra.mxu0 %v356
    %404 = vmatprep.subr.bf16.mxu0 0
    %405 = vmatpush2.bf16.msra.mxu0 0
    %406 = vmatprep.subr.bf16.mxu0 0
    %407 = vmatpush2.bf16.msra.mxu0 0
    %408 = vmatprep.subr.bf16.mxu0 0
    %409 = vmatpush2.bf16.msra.mxu0 0
    %410 = vmatprep.subr.bf16.mxu0 0
    %411 = vmatpush2.bf16.msra.mxu0 0
    %412 = vmatprep.subr.bf16.mxu0 0
    %413 = vmatpush2.bf16.msra.mxu0 0
    %414 = vmatprep.subr.bf16.mxu0 0
    %415 = vmatpush2.bf16.msra.mxu0 0
    %416 = vmatprep.subr.bf16.mxu0 0
    %417 = vmatpush2.bf16.msra.mxu0 0
    %418 = vmatprep.subr.bf16.mxu0 0
    %419 = vmatpush2.bf16.msra.mxu0 0
    %420 = vmatprep.mubr.bf16.mxu0 0
    %421 = vmatmul.mubr.bf16.gmra.mxu0 %v291
    %v422 = vpop.f32.mrf.mxu0
    %v423 = vadd.f32 0.0, %v422
    %v424 = vpop.f32.mrf.mxu0
    %v425 = vadd.f32 0.0, %v424
    %v426 = vpop.f32.mrf.mxu0
    %v427 = vadd.f32 0.0, %v426
    %v428 = vpop.f32.mrf.mxu0
    %v429 = vadd.f32 0.0, %v428
    %430 = vdwg.mxu0
    %v431 = vld [vmem:[#allocation5] sm:$0xff]
    %v432 = vld [vmem:[#allocation5 + $0x8] sm:$0xff]
    %v433 = vld [vmem:[#allocation5 + $0x10] sm:$0xff]
    %v434 = vld [vmem:[#allocation5 + $0x18] sm:$0xff]
    %v435 = vld [vmem:[#allocation5 + $0x20] sm:$0xff]
    %v436 = vld [vmem:[#allocation5 + $0x28] sm:$0xff]
    %v437 = vld [vmem:[#allocation5 + $0x30] sm:$0xff]
    %v438 = vld [vmem:[#allocation5 + $0x38] sm:$0xff]
    %v439 = vld [vmem:[#allocation5 + $0x40] sm:$0xff]
    %v440 = vld [vmem:[#allocation5 + $0x48] sm:$0xff]
    %v441 = vld [vmem:[#allocation5 + $0x50] sm:$0xff]
    %v442 = vld [vmem:[#allocation5 + $0x58] sm:$0xff]
    %v443 = vld [vmem:[#allocation5 + $0x60] sm:$0xff]
    %v444 = vld [vmem:[#allocation5 + $0x68] sm:$0xff]
    %v445 = vld [vmem:[#allocation5 + $0x70] sm:$0xff]
    %v446 = vld [vmem:[#allocation5 + $0x78] sm:$0xff]
    %v463 = vunpack.c.l.b16 %v431
    %v464 = vunpack.c.h.b16 %v431
    %v465 = vunpack.c.l.b16 %v432
    %v466 = vunpack.c.h.b16 %v432
    %v467 = vunpack.c.l.b16 %v433
    %v468 = vunpack.c.h.b16 %v433
    %v469 = vunpack.c.l.b16 %v434
    %v470 = vunpack.c.h.b16 %v434
    %v471 = vunpack.c.l.b16 %v435
    %v472 = vunpack.c.h.b16 %v435
    %v473 = vunpack.c.l.b16 %v436
    %v474 = vunpack.c.h.b16 %v436
    %v475 = vunpack.c.l.b16 %v437
    %v476 = vunpack.c.h.b16 %v437
    %v477 = vunpack.c.l.b16 %v438
    %v478 = vunpack.c.h.b16 %v438
    %v479 = vunpack.c.l.b16 %v439
    %v480 = vunpack.c.h.b16 %v439
    %v481 = vunpack.c.l.b16 %v440
    %v482 = vunpack.c.h.b16 %v440
    %v483 = vunpack.c.l.b16 %v441
    %v484 = vunpack.c.h.b16 %v441
    %v485 = vunpack.c.l.b16 %v442
    %v486 = vunpack.c.h.b16 %v442
    %v487 = vunpack.c.l.b16 %v443
    %v488 = vunpack.c.h.b16 %v443
    %v489 = vunpack.c.l.b16 %v444
    %v490 = vunpack.c.h.b16 %v444
    %v491 = vunpack.c.l.b16 %v445
    %v492 = vunpack.c.h.b16 %v445
    %v493 = vunpack.c.l.b16 %v446
    %v494 = vunpack.c.h.b16 %v446
    %v495 = vpack.c.b16 %v465, %v463
    %v496 = vpack.c.b16 %v466, %v464
    %v497 = vpack.c.b16 %v469, %v467
    %v498 = vpack.c.b16 %v470, %v468
    %v499 = vpack.c.b16 %v473, %v471
    %v500 = vpack.c.b16 %v474, %v472
    %v501 = vpack.c.b16 %v477, %v475
    %v502 = vpack.c.b16 %v478, %v476
    %v503 = vpack.c.b16 %v481, %v479
    %v504 = vpack.c.b16 %v482, %v480
    %v505 = vpack.c.b16 %v485, %v483
    %v506 = vpack.c.b16 %v486, %v484
    %v507 = vpack.c.b16 %v489, %v487
    %v508 = vpack.c.b16 %v490, %v488
    %v509 = vpack.c.b16 %v493, %v491
    %v510 = vpack.c.b16 %v494, %v492
    %527 = vmatprep.subr.bf16.mxu0 %v510
    %528 = vmatpush1.bf16.msra.mxu0 %v509
    %529 = vmatprep.subr.bf16.mxu0 %v508
    %530 = vmatpush1.bf16.msra.mxu0 %v507
    %531 = vmatprep.subr.bf16.mxu0 %v506
    %532 = vmatpush1.bf16.msra.mxu0 %v505
    %533 = vmatprep.subr.bf16.mxu0 %v504
    %534 = vmatpush1.bf16.msra.mxu0 %v503
    %535 = vmatprep.subr.bf16.mxu0 %v502
    %536 = vmatpush1.bf16.msra.mxu0 %v501
    %537 = vmatprep.subr.bf16.mxu0 %v500
    %538 = vmatpush1.bf16.msra.mxu0 %v499
    %539 = vmatprep.subr.bf16.mxu0 %v498
    %540 = vmatpush1.bf16.msra.mxu0 %v497
    %541 = vmatprep.subr.bf16.mxu0 %v496
    %542 = vmatpush1.bf16.msra.mxu0 %v495
    %543 = vmatprep.subr.bf16.mxu0 0
    %544 = vmatpush2.bf16.msra.mxu0 0
    %545 = vmatprep.subr.bf16.mxu0 0
    %546 = vmatpush2.bf16.msra.mxu0 0
    %547 = vmatprep.subr.bf16.mxu0 0
    %548 = vmatpush2.bf16.msra.mxu0 0
    %549 = vmatprep.subr.bf16.mxu0 0
    %550 = vmatpush2.bf16.msra.mxu0 0
    %551 = vmatprep.subr.bf16.mxu0 0
    %552 = vmatpush2.bf16.msra.mxu0 0
    %553 = vmatprep.subr.bf16.mxu0 0
    %554 = vmatpush2.bf16.msra.mxu0 0
    %555 = vmatprep.subr.bf16.mxu0 0
    %556 = vmatpush2.bf16.msra.mxu0 0
    %557 = vmatprep.subr.bf16.mxu0 0
    %558 = vmatpush2.bf16.msra.mxu0 0
    %559 = vmatprep.mubr.bf16.mxu0 0
    %560 = vmatmul.mubr.bf16.gmra.mxu0 %v291
    %v561 = vpop.f32.mrf.mxu0
    %v562 = vadd.f32 0.0, %v561
    %v563 = vpop.f32.mrf.mxu0
    %v564 = vadd.f32 0.0, %v563
    %v565 = vpop.f32.mrf.mxu0
    %v566 = vadd.f32 0.0, %v565
    %v567 = vpop.f32.mrf.mxu0
    %v568 = vadd.f32 0.0, %v567
    %569 = vdwg.mxu0
    %v570 = vld [vmem:[%s11] sm:$0x77]
    %v575 = vunpack.c.l.b16 %v212
    %v576 = vunpack.c.l.b16 %v213
    %v577 = vunpack.c.l.b16 %v214
    %v578 = vunpack.c.l.b16 %v215
    %v579 = vpack.c.b16 %v576, %v575
    %v580 = vpack.c.b16 %v578, %v577
    %v582 = vunpack.c.l.b16 %v570
    %v583 = vunpack.c.h.b16 %v570
    %v584 = vpack.c.b16 %v582, %v582
    %v585 = vpack.c.b16 %v583, %v583
    %vm586 = vcmask 39936
    %v588 = vsel %vm586, %v579, 0
    %v591 = vsel %vm586, %v580, 0
    %vm593 = vcmask 1041408
    %vm594 = vcmask 1042432
    %v595 = vsel %vm593, 4294967295, 65535
    %v596 = vsel %vm594, %v595, 0
    %v598 = vand.u32 %v584, %v596
    %v601 = vand.u32 %v585, %v596
    %603 = vmatprep.subr.bf16.mxu0 0
    %604 = vmatpush1.bf16.msra.mxu0 0
    %605 = vmatprep.subr.bf16.mxu0 0
    %606 = vmatpush1.bf16.msra.mxu0 0
    %607 = vmatprep.subr.bf16.mxu0 0
    %608 = vmatpush1.bf16.msra.mxu0 0
    %609 = vmatprep.subr.bf16.mxu0 0
    %610 = vmatpush1.bf16.msra.mxu0 0
    %611 = vmatprep.subr.bf16.mxu0 0
    %612 = vmatpush1.bf16.msra.mxu0 0
    %613 = vmatprep.subr.bf16.mxu0 0
    %614 = vmatpush1.bf16.msra.mxu0 0
    %615 = vmatprep.subr.bf16.mxu0 0
    %616 = vmatpush1.bf16.msra.mxu0 0
    %617 = vmatprep.subr.bf16.mxu0 %v601
    %618 = vmatpush1.bf16.msra.mxu0 %v598
    %619 = vmatprep.subr.bf16.mxu0 0
    %620 = vmatpush2.bf16.msra.mxu0 0
    %621 = vmatprep.subr.bf16.mxu0 0
    %622 = vmatpush2.bf16.msra.mxu0 0
    %623 = vmatprep.subr.bf16.mxu0 0
    %624 = vmatpush2.bf16.msra.mxu0 0
    %625 = vmatprep.subr.bf16.mxu0 0
    %626 = vmatpush2.bf16.msra.mxu0 0
    %627 = vmatprep.subr.bf16.mxu0 0
    %628 = vmatpush2.bf16.msra.mxu0 0
    %629 = vmatprep.subr.bf16.mxu0 0
    %630 = vmatpush2.bf16.msra.mxu0 0
    %631 = vmatprep.subr.bf16.mxu0 0
    %632 = vmatpush2.bf16.msra.mxu0 0
    %633 = vmatprep.subr.bf16.mxu0 0
    %634 = vmatpush2.bf16.msra.mxu0 0
    %635 = vmatprep.mubr.bf16.mxu0 0
    %636 = vmatmul.mubr.bf16.gmra.mxu0 %v588
    %v637 = vpop.f32.mrf.mxu0
    %v638 = vadd.f32 0.0, %v637
    %v639 = vpop.f32.mrf.mxu0
    %v640 = vadd.f32 0.0, %v639
    %v641 = vpop.f32.mrf.mxu0
    %v642 = vadd.f32 0.0, %v641
    %v643 = vpop.f32.mrf.mxu0
    %v644 = vadd.f32 0.0, %v643
    %645 = vmatprep.mubr.bf16.mxu0 0
    %646 = vmatmul.mubr.bf16.gmra.mxu0 %v591
    %v647 = vpop.f32.mrf.mxu0
    %v648 = vadd.f32 0.0, %v647
    %v649 = vpop.f32.mrf.mxu0
    %v650 = vadd.f32 0.0, %v649
    %v651 = vpop.f32.mrf.mxu0
    %v652 = vadd.f32 0.0, %v651
    %v653 = vpop.f32.mrf.mxu0
    %v654 = vadd.f32 0.0, %v653
    %655 = vdwg.mxu0
    %v656 = vpack.c.bf16 %v427, %v423
    %v657 = vpack.c.bf16 %v429, %v425
    %v658 = vpack.c.bf16 %v566, %v562
    %v659 = vpack.c.bf16 %v568, %v564
    %vm660 = vcmask 261120
    %v662 = vsel %vm660, %v274, 0
    %v665 = vsel %vm660, %v275, 0
    %667 = vmatprep.subr.bf16.mxu0 0
    %668 = vmatpush1.bf16.msra.mxu0 0
    %669 = vmatprep.subr.bf16.mxu0 0
    %670 = vmatpush1.bf16.msra.mxu0 0
    %671 = vmatprep.subr.bf16.mxu0 0
    %672 = vmatpush1.bf16.msra.mxu0 0
    %673 = vmatprep.subr.bf16.mxu0 0
    %674 = vmatpush1.bf16.msra.mxu0 0
    %675 = vmatprep.subr.bf16.mxu0 0
    %676 = vmatpush1.bf16.msra.mxu0 0
    %677 = vmatprep.subr.bf16.mxu0 0
    %678 = vmatpush1.bf16.msra.mxu0 0
    %679 = vmatprep.subr.bf16.mxu0 %v659
    %680 = vmatpush1.bf16.msra.mxu0 %v658
    %681 = vmatprep.subr.bf16.mxu0 %v657
    %682 = vmatpush1.bf16.msra.mxu0 %v656
    %683 = vmatprep.subr.bf16.mxu0 0
    %684 = vmatpush2.bf16.msra.mxu0 0
    %685 = vmatprep.subr.bf16.mxu0 0
    %686 = vmatpush2.bf16.msra.mxu0 0
    %687 = vmatprep.subr.bf16.mxu0 0
    %688 = vmatpush2.bf16.msra.mxu0 0
    %689 = vmatprep.subr.bf16.mxu0 0
    %690 = vmatpush2.bf16.msra.mxu0 0
    %691 = vmatprep.subr.bf16.mxu0 0
    %692 = vmatpush2.bf16.msra.mxu0 0
    %693 = vmatprep.subr.bf16.mxu0 0
    %694 = vmatpush2.bf16.msra.mxu0 0
    %695 = vmatprep.subr.bf16.mxu0 0
    %696 = vmatpush2.bf16.msra.mxu0 0
    %697 = vmatprep.subr.bf16.mxu0 0
    %698 = vmatpush2.bf16.msra.mxu0 0
    %699 = vmatprep.mubr.bf16.mxu0 0
    %700 = vmatmul.mubr.bf16.gmra.mxu0 %v662
    %v701 = vpop.f32.mrf.mxu0
    %v702 = vadd.f32 %v638, %v701
    %v703 = vpop.f32.mrf.mxu0
    %v704 = vadd.f32 %v640, %v703
    %v705 = vpop.f32.mrf.mxu0
    %v706 = vadd.f32 %v642, %v705
    %v707 = vpop.f32.mrf.mxu0
    %v708 = vadd.f32 %v644, %v707
    %709 = vmatprep.mubr.bf16.mxu0 0
    %710 = vmatmul.mubr.bf16.gmra.mxu0 %v665
    %v711 = vpop.f32.mrf.mxu0
    %v712 = vadd.f32 %v648, %v711
    %v713 = vpop.f32.mrf.mxu0
    %v714 = vadd.f32 %v650, %v713
    %v715 = vpop.f32.mrf.mxu0
    %v716 = vadd.f32 %v652, %v715
    %v717 = vpop.f32.mrf.mxu0
    %v718 = vadd.f32 %v654, %v717
    %719 = vdwg.mxu0
    %v720 = vxor.u32 %v702, 2147483648
    %v721 = vxor.u32 %v706, 2147483648
    %v722 = vxor.u32 %v712, 2147483648
    %v723 = vxor.u32 %v716, 2147483648
    %v724 = vmul.f32 %v720, 1.442695
    %v725 = vpow.pop %v724
    %v726 = vmul.f32 %v721, 1.442695
    %v727 = vpow.pop %v726
    %v728 = vmul.f32 %v722, 1.442695
    %v729 = vpow.pop %v728
    %v730 = vmul.f32 %v723, 1.442695
    %v731 = vpow.pop %v730
    %v732 = vadd.f32 %v725, 1.0
    %v733 = vadd.f32 %v727, 1.0
    %v734 = vadd.f32 %v729, 1.0
    %v735 = vadd.f32 %v731, 1.0
    %v736 = vrcp.pop %v732
    %v737 = vmul.f32 1.0, %v736
    %v738 = vrcp.pop %v733
    %v739 = vmul.f32 1.0, %v738
    %v740 = vrcp.pop %v734
    %v741 = vmul.f32 1.0, %v740
    %v742 = vrcp.pop %v735
    %v743 = vmul.f32 1.0, %v742
    %v744 = vmax.f32 %v704, 0.0
    %v745 = vmax.f32 %v708, 0.0
    %v746 = vmax.f32 %v714, 0.0
    %v747 = vmax.f32 %v718, 0.0
    %v748 = vand.u32 2147483647, %v704
    %v749 = vand.u32 2147483647, %v708
    %v750 = vand.u32 2147483647, %v714
    %v751 = vand.u32 2147483647, %v718
    %v752 = vsub.f32 0.0, %v748
    %v753 = vsub.f32 0.0, %v749
    %v754 = vsub.f32 0.0, %v750
    %v755 = vsub.f32 0.0, %v751
    %v756 = vmul.f32 %v752, 1.442695
    %v757 = vpow.pop %v756
    %v758 = vmul.f32 %v753, 1.442695
    %v759 = vpow.pop %v758
    %v760 = vmul.f32 %v754, 1.442695
    %v761 = vpow.pop %v760
    %v762 = vmul.f32 %v755, 1.442695
    %v763 = vpow.pop %v762
    %v764 = vadd.f32 %v757, 1.0
    %v765 = vlog2.pop %v764
    %v766 = vmul.f32 %v765, 0.6931472
    %v767 = vmul.f32 -0.5, %v757
    %v768 = vadd.f32 %v767, 1.0
    %v769 = vmul.f32 %v768, %v757
    %v770 = vand.u32 2147483647, %v757
    %vm771 = vcmp.lt.f32.partialorder %v770, 0.0004427343
    %v772 = vsel %vm771, %v769, %v766
    %v773 = vadd.f32 %v759, 1.0
    %v774 = vlog2.pop %v773
    %v775 = vmul.f32 %v774, 0.6931472
    %v776 = vmul.f32 -0.5, %v759
    %v777 = vadd.f32 %v776, 1.0
    %v778 = vmul.f32 %v777, %v759
    %v779 = vand.u32 2147483647, %v759
    %vm780 = vcmp.lt.f32.partialorder %v779, 0.0004427343
    %v781 = vsel %vm780, %v778, %v775
    %v782 = vadd.f32 %v761, 1.0
    %v783 = vlog2.pop %v782
    %v784 = vmul.f32 %v783, 0.6931472
    %v785 = vmul.f32 -0.5, %v761
    %v786 = vadd.f32 %v785, 1.0
    %v787 = vmul.f32 %v786, %v761
    %v788 = vand.u32 2147483647, %v761
    %vm789 = vcmp.lt.f32.partialorder %v788, 0.0004427343
    %v790 = vsel %vm789, %v787, %v784
    %v791 = vadd.f32 %v763, 1.0
    %v792 = vlog2.pop %v791
    %v793 = vmul.f32 %v792, 0.6931472
    %v794 = vmul.f32 -0.5, %v763
    %v795 = vadd.f32 %v794, 1.0
    %v796 = vmul.f32 %v795, %v763
    %v797 = vand.u32 2147483647, %v763
    %vm798 = vcmp.lt.f32.partialorder %v797, 0.0004427343
    %v799 = vsel %vm798, %v796, %v793
    %v800 = vadd.f32 %v744, %v772
    %v801 = vadd.f32 %v745, %v781
    %v802 = vadd.f32 %v746, %v790
    %v803 = vadd.f32 %v747, %v799
    %v804 = vmul.f32 %v737, %v800
    %v805 = vmul.f32 %v739, %v801
    %v806 = vmul.f32 %v741, %v802
    %v807 = vmul.f32 %v743, %v803
    %v808 = vpack.c.bf16 %v805, %v804
    %v809 = vpack.c.bf16 %v807, %v806
    %v811 = vsel %vm660, %v290, 0
    %813 = vmatprep.subr.bf16.mxu0 0
    %814 = vmatpush1.bf16.msra.mxu0 0
    %815 = vmatprep.subr.bf16.mxu0 0
    %816 = vmatpush1.bf16.msra.mxu0 0
    %817 = vmatprep.subr.bf16.mxu0 0
    %818 = vmatpush1.bf16.msra.mxu0 0
    %819 = vmatprep.subr.bf16.mxu0 0
    %820 = vmatpush1.bf16.msra.mxu0 0
    %821 = vmatprep.subr.bf16.mxu0 0
    %822 = vmatpush1.bf16.msra.mxu0 0
    %823 = vmatprep.subr.bf16.mxu0 0
    %824 = vmatpush1.bf16.msra.mxu0 0
    %825 = vmatprep.subr.bf16.mxu0 0
    %826 = vmatpush1.bf16.msra.mxu0 %v809
    %827 = vmatprep.subr.bf16.mxu0 0
    %828 = vmatpush1.bf16.msra.mxu0 %v808
    %829 = vmatprep.subr.bf16.mxu0 0
    %830 = vmatpush2.bf16.msra.mxu0 0
    %831 = vmatprep.subr.bf16.mxu0 0
    %832 = vmatpush2.bf16.msra.mxu0 0
    %833 = vmatprep.subr.bf16.mxu0 0
    %834 = vmatpush2.bf16.msra.mxu0 0
    %835 = vmatprep.subr.bf16.mxu0 0
    %836 = vmatpush2.bf16.msra.mxu0 0
    %837 = vmatprep.subr.bf16.mxu0 0
    %838 = vmatpush2.bf16.msra.mxu0 0
    %839 = vmatprep.subr.bf16.mxu0 0
    %840 = vmatpush2.bf16.msra.mxu0 0
    %841 = vmatprep.subr.bf16.mxu0 0
    %842 = vmatpush2.bf16.msra.mxu0 0
    %843 = vmatprep.subr.bf16.mxu0 0
    %844 = vmatpush2.bf16.msra.mxu0 0
    %845 = vmatprep.mubr.bf16.mxu0 0
    %846 = vmatmul.mubr.bf16.gmra.mxu0 %v811
    %v847 = vpop.f32.mrf.mxu0
    %v848 = vadd.f32 0.0, %v847
    %v849 = vpop.f32.mrf.mxu0
    %v850 = vpop.f32.mrf.mxu0
    %v851 = vadd.f32 0.0, %v850
    %v852 = vpop.f32.mrf.mxu0
    %853 = vdwg.mxu0
    %v854 = vadd.f32 %v210, %v848
    %v855 = vadd.f32 %v211, %v851
    %v856 = vmax.f32 %v854, 0.0
    %v857 = vmax.f32 %v855, 0.0
    %v858 = vpack.c.bf16 %v857, %v856
    %s859 = scalar_lea.vmem [#allocation2], 128
    %v860 = vld [vmem:[%s859] sm:$0xff]
    %v861 = vld [vmem:[%s859 + $0x8] sm:$0xff]
    %v862 = vld [vmem:[%s859 + $0x10] sm:$0xff]
    %v863 = vld [vmem:[%s859 + $0x18] sm:$0xff]
    %v864 = vld [vmem:[%s859 + $0x20] sm:$0xff]
    %v865 = vld [vmem:[%s859 + $0x28] sm:$0xff]
    %v866 = vld [vmem:[%s859 + $0x30] sm:$0xff]
    %v867 = vld [vmem:[%s859 + $0x38] sm:$0xff]
    %v868 = vld [vmem:[%s859 + $0x40] sm:$0xff]
    %v869 = vld [vmem:[%s859 + $0x48] sm:$0xff]
    %v870 = vld [vmem:[%s859 + $0x50] sm:$0xff]
    %v871 = vld [vmem:[%s859 + $0x58] sm:$0xff]
    %v872 = vld [vmem:[%s859 + $0x60] sm:$0xff]
    %v873 = vld [vmem:[%s859 + $0x68] sm:$0xff]
    %v874 = vld [vmem:[%s859 + $0x70] sm:$0xff]
    %v875 = vld [vmem:[%s859 + $0x78] sm:$0xff]
    %v892 = vunpack.c.l.b16 %v860
    %v893 = vunpack.c.h.b16 %v860
    %v894 = vunpack.c.l.b16 %v861
    %v895 = vunpack.c.h.b16 %v861
    %v896 = vunpack.c.l.b16 %v862
    %v897 = vunpack.c.h.b16 %v862
    %v898 = vunpack.c.l.b16 %v863
    %v899 = vunpack.c.h.b16 %v863
    %v900 = vunpack.c.l.b16 %v864
    %v901 = vunpack.c.h.b16 %v864
    %v902 = vunpack.c.l.b16 %v865
    %v903 = vunpack.c.h.b16 %v865
    %v904 = vunpack.c.l.b16 %v866
    %v905 = vunpack.c.h.b16 %v866
    %v906 = vunpack.c.l.b16 %v867
    %v907 = vunpack.c.h.b16 %v867
    %v908 = vunpack.c.l.b16 %v868
    %v909 = vunpack.c.h.b16 %v868
    %v910 = vunpack.c.l.b16 %v869
    %v911 = vunpack.c.h.b16 %v869
    %v912 = vunpack.c.l.b16 %v870
    %v913 = vunpack.c.h.b16 %v870
    %v914 = vunpack.c.l.b16 %v871
    %v915 = vunpack.c.h.b16 %v871
    %v916 = vunpack.c.l.b16 %v872
    %v917 = vunpack.c.h.b16 %v872
    %v918 = vunpack.c.l.b16 %v873
    %v919 = vunpack.c.h.b16 %v873
    %v920 = vunpack.c.l.b16 %v874
    %v921 = vunpack.c.h.b16 %v874
    %v922 = vunpack.c.l.b16 %v875
    %v923 = vunpack.c.h.b16 %v875
    %v924 = vpack.c.b16 %v894, %v892
    %v925 = vpack.c.b16 %v895, %v893
    %v926 = vpack.c.b16 %v898, %v896
    %v927 = vpack.c.b16 %v899, %v897
    %v928 = vpack.c.b16 %v902, %v900
    %v929 = vpack.c.b16 %v903, %v901
    %v930 = vpack.c.b16 %v906, %v904
    %v931 = vpack.c.b16 %v907, %v905
    %v932 = vpack.c.b16 %v910, %v908
    %v933 = vpack.c.b16 %v911, %v909
    %v934 = vpack.c.b16 %v914, %v912
    %v935 = vpack.c.b16 %v915, %v913
    %v936 = vpack.c.b16 %v918, %v916
    %v937 = vpack.c.b16 %v919, %v917
    %v938 = vpack.c.b16 %v922, %v920
    %v939 = vpack.c.b16 %v923, %v921
    %956 = vmatprep.subr.bf16.mxu0 %v939
    %957 = vmatpush1.bf16.msra.mxu0 %v938
    %958 = vmatprep.subr.bf16.mxu0 %v937
    %959 = vmatpush1.bf16.msra.mxu0 %v936
    %960 = vmatprep.subr.bf16.mxu0 %v935
    %961 = vmatpush1.bf16.msra.mxu0 %v934
    %962 = vmatprep.subr.bf16.mxu0 %v933
    %963 = vmatpush1.bf16.msra.mxu0 %v932
    %964 = vmatprep.subr.bf16.mxu0 %v931
    %965 = vmatpush1.bf16.msra.mxu0 %v930
    %966 = vmatprep.subr.bf16.mxu0 %v929
    %967 = vmatpush1.bf16.msra.mxu0 %v928
    %968 = vmatprep.subr.bf16.mxu0 %v927
    %969 = vmatpush1.bf16.msra.mxu0 %v926
    %970 = vmatprep.subr.bf16.mxu0 %v925
    %971 = vmatpush1.bf16.msra.mxu0 %v924
    %972 = vmatprep.subr.bf16.mxu0 0
    %973 = vmatpush2.bf16.msra.mxu0 0
    %974 = vmatprep.subr.bf16.mxu0 0
    %975 = vmatpush2.bf16.msra.mxu0 0
    %976 = vmatprep.subr.bf16.mxu0 0
    %977 = vmatpush2.bf16.msra.mxu0 0
    %978 = vmatprep.subr.bf16.mxu0 0
    %979 = vmatpush2.bf16.msra.mxu0 0
    %980 = vmatprep.subr.bf16.mxu0 0
    %981 = vmatpush2.bf16.msra.mxu0 0
    %982 = vmatprep.subr.bf16.mxu0 0
    %983 = vmatpush2.bf16.msra.mxu0 0
    %984 = vmatprep.subr.bf16.mxu0 0
    %985 = vmatpush2.bf16.msra.mxu0 0
    %986 = vmatprep.subr.bf16.mxu0 0
    %987 = vmatpush2.bf16.msra.mxu0 0
    %988 = vmatprep.mubr.bf16.mxu0 0
    %989 = vmatmul.mubr.bf16.gmra.mxu0 %v858
    %v990 = vpop.f32.mrf.mxu0
    %v991 = vadd.f32 0.0, %v990
    %v992 = vpop.f32.mrf.mxu0
    %v993 = vadd.f32 0.0, %v992
    %v994 = vpop.f32.mrf.mxu0
    %v995 = vadd.f32 0.0, %v994
    %v996 = vpop.f32.mrf.mxu0
    %v997 = vadd.f32 0.0, %v996
    %998 = vdwg.mxu0
    %s999 = scalar_lea.vmem [#allocation5], 128
    %v1000 = vld [vmem:[%s999] sm:$0xff]
    %v1001 = vld [vmem:[%s999 + $0x8] sm:$0xff]
    %v1002 = vld [vmem:[%s999 + $0x10] sm:$0xff]
    %v1003 = vld [vmem:[%s999 + $0x18] sm:$0xff]
    %v1004 = vld [vmem:[%s999 + $0x20] sm:$0xff]
    %v1005 = vld [vmem:[%s999 + $0x28] sm:$0xff]
    %v1006 = vld [vmem:[%s999 + $0x30] sm:$0xff]
    %v1007 = vld [vmem:[%s999 + $0x38] sm:$0xff]
    %v1008 = vld [vmem:[%s999 + $0x40] sm:$0xff]
    %v1009 = vld [vmem:[%s999 + $0x48] sm:$0xff]
    %v1010 = vld [vmem:[%s999 + $0x50] sm:$0xff]
    %v1011 = vld [vmem:[%s999 + $0x58] sm:$0xff]
    %v1012 = vld [vmem:[%s999 + $0x60] sm:$0xff]
    %v1013 = vld [vmem:[%s999 + $0x68] sm:$0xff]
    %v1014 = vld [vmem:[%s999 + $0x70] sm:$0xff]
    %v1015 = vld [vmem:[%s999 + $0x78] sm:$0xff]
    %v1032 = vunpack.c.l.b16 %v1000
    %v1033 = vunpack.c.h.b16 %v1000
    %v1034 = vunpack.c.l.b16 %v1001
    %v1035 = vunpack.c.h.b16 %v1001
    %v1036 = vunpack.c.l.b16 %v1002
    %v1037 = vunpack.c.h.b16 %v1002
    %v1038 = vunpack.c.l.b16 %v1003
    %v1039 = vunpack.c.h.b16 %v1003
    %v1040 = vunpack.c.l.b16 %v1004
    %v1041 = vunpack.c.h.b16 %v1004
    %v1042 = vunpack.c.l.b16 %v1005
    %v1043 = vunpack.c.h.b16 %v1005
    %v1044 = vunpack.c.l.b16 %v1006
    %v1045 = vunpack.c.h.b16 %v1006
    %v1046 = vunpack.c.l.b16 %v1007
    %v1047 = vunpack.c.h.b16 %v1007
    %v1048 = vunpack.c.l.b16 %v1008
    %v1049 = vunpack.c.h.b16 %v1008
    %v1050 = vunpack.c.l.b16 %v1009
    %v1051 = vunpack.c.h.b16 %v1009
    %v1052 = vunpack.c.l.b16 %v1010
    %v1053 = vunpack.c.h.b16 %v1010
    %v1054 = vunpack.c.l.b16 %v1011
    %v1055 = vunpack.c.h.b16 %v1011
    %v1056 = vunpack.c.l.b16 %v1012
    %v1057 = vunpack.c.h.b16 %v1012
    %v1058 = vunpack.c.l.b16 %v1013
    %v1059 = vunpack.c.h.b16 %v1013
    %v1060 = vunpack.c.l.b16 %v1014
    %v1061 = vunpack.c.h.b16 %v1014
    %v1062 = vunpack.c.l.b16 %v1015
    %v1063 = vunpack.c.h.b16 %v1015
    %v1064 = vpack.c.b16 %v1034, %v1032
    %v1065 = vpack.c.b16 %v1035, %v1033
    %v1066 = vpack.c.b16 %v1038, %v1036
    %v1067 = vpack.c.b16 %v1039, %v1037
    %v1068 = vpack.c.b16 %v1042, %v1040
    %v1069 = vpack.c.b16 %v1043, %v1041
    %v1070 = vpack.c.b16 %v1046, %v1044
    %v1071 = vpack.c.b16 %v1047, %v1045
    %v1072 = vpack.c.b16 %v1050, %v1048
    %v1073 = vpack.c.b16 %v1051, %v1049
    %v1074 = vpack.c.b16 %v1054, %v1052
    %v1075 = vpack.c.b16 %v1055, %v1053
    %v1076 = vpack.c.b16 %v1058, %v1056
    %v1077 = vpack.c.b16 %v1059, %v1057
    %v1078 = vpack.c.b16 %v1062, %v1060
    %v1079 = vpack.c.b16 %v1063, %v1061
    %1096 = vmatprep.subr.bf16.mxu0 %v1079
    %1097 = vmatpush1.bf16.msra.mxu0 %v1078
    %1098 = vmatprep.subr.bf16.mxu0 %v1077
    %1099 = vmatpush1.bf16.msra.mxu0 %v1076
    %1100 = vmatprep.subr.bf16.mxu0 %v1075
    %1101 = vmatpush1.bf16.msra.mxu0 %v1074
    %1102 = vmatprep.subr.bf16.mxu0 %v1073
    %1103 = vmatpush1.bf16.msra.mxu0 %v1072
    %1104 = vmatprep.subr.bf16.mxu0 %v1071
    %1105 = vmatpush1.bf16.msra.mxu0 %v1070
    %1106 = vmatprep.subr.bf16.mxu0 %v1069
    %1107 = vmatpush1.bf16.msra.mxu0 %v1068
    %1108 = vmatprep.subr.bf16.mxu0 %v1067
    %1109 = vmatpush1.bf16.msra.mxu0 %v1066
    %1110 = vmatprep.subr.bf16.mxu0 %v1065
    %1111 = vmatpush1.bf16.msra.mxu0 %v1064
    %1112 = vmatprep.subr.bf16.mxu0 0
    %1113 = vmatpush2.bf16.msra.mxu0 0
    %1114 = vmatprep.subr.bf16.mxu0 0
    %1115 = vmatpush2.bf16.msra.mxu0 0
    %1116 = vmatprep.subr.bf16.mxu0 0
    %1117 = vmatpush2.bf16.msra.mxu0 0
    %1118 = vmatprep.subr.bf16.mxu0 0
    %1119 = vmatpush2.bf16.msra.mxu0 0
    %1120 = vmatprep.subr.bf16.mxu0 0
    %1121 = vmatpush2.bf16.msra.mxu0 0
    %1122 = vmatprep.subr.bf16.mxu0 0
    %1123 = vmatpush2.bf16.msra.mxu0 0
    %1124 = vmatprep.subr.bf16.mxu0 0
    %1125 = vmatpush2.bf16.msra.mxu0 0
    %1126 = vmatprep.subr.bf16.mxu0 0
    %1127 = vmatpush2.bf16.msra.mxu0 0
    %1128 = vmatprep.mubr.bf16.mxu0 0
    %1129 = vmatmul.mubr.bf16.gmra.mxu0 %v858
    %v1130 = vpop.f32.mrf.mxu0
    %v1131 = vadd.f32 0.0, %v1130
    %v1132 = vpop.f32.mrf.mxu0
    %v1133 = vadd.f32 0.0, %v1132
    %v1134 = vpop.f32.mrf.mxu0
    %v1135 = vadd.f32 0.0, %v1134
    %v1136 = vpop.f32.mrf.mxu0
    %v1137 = vadd.f32 0.0, %v1136
    %1138 = vdwg.mxu0
    %s1139 = scalar_lea.vmem %s11, 8
    %v1140 = vld [vmem:[%s1139] sm:$0x77]
    %v1142 = vunpack.c.l.b16 %v1140
    %v1143 = vunpack.c.h.b16 %v1140
    %v1144 = vpack.c.b16 %v1142, %v1142
    %v1145 = vpack.c.b16 %v1143, %v1143
    %v1147 = vand.u32 %v1144, %v596
    %v1150 = vand.u32 %v1145, %v596
    %1152 = vmatprep.subr.bf16.mxu0 0
    %1153 = vmatpush1.bf16.msra.mxu0 0
    %1154 = vmatprep.subr.bf16.mxu0 0
    %1155 = vmatpush1.bf16.msra.mxu0 0
    %1156 = vmatprep.subr.bf16.mxu0 0
    %1157 = vmatpush1.bf16.msra.mxu0 0
    %1158 = vmatprep.subr.bf16.mxu0 0
    %1159 = vmatpush1.bf16.msra.mxu0 0
    %1160 = vmatprep.subr.bf16.mxu0 0
    %1161 = vmatpush1.bf16.msra.mxu0 0
    %1162 = vmatprep.subr.bf16.mxu0 0
    %1163 = vmatpush1.bf16.msra.mxu0 0
    %1164 = vmatprep.subr.bf16.mxu0 0
    %1165 = vmatpush1.bf16.msra.mxu0 0
    %1166 = vmatprep.subr.bf16.mxu0 %v1150
    %1167 = vmatpush1.bf16.msra.mxu0 %v1147
    %1168 = vmatprep.subr.bf16.mxu0 0
    %1169 = vmatpush2.bf16.msra.mxu0 0
    %1170 = vmatprep.subr.bf16.mxu0 0
    %1171 = vmatpush2.bf16.msra.mxu0 0
    %1172 = vmatprep.subr.bf16.mxu0 0
    %1173 = vmatpush2.bf16.msra.mxu0 0
    %1174 = vmatprep.subr.bf16.mxu0 0
    %1175 = vmatpush2.bf16.msra.mxu0 0
    %1176 = vmatprep.subr.bf16.mxu0 0
    %1177 = vmatpush2.bf16.msra.mxu0 0
    %1178 = vmatprep.subr.bf16.mxu0 0
    %1179 = vmatpush2.bf16.msra.mxu0 0
    %1180 = vmatprep.subr.bf16.mxu0 0
    %1181 = vmatpush2.bf16.msra.mxu0 0
    %1182 = vmatprep.subr.bf16.mxu0 0
    %1183 = vmatpush2.bf16.msra.mxu0 0
    %1184 = vmatprep.mubr.bf16.mxu0 0
    %1185 = vmatmul.mubr.bf16.gmra.mxu0 %v588
    %v1186 = vpop.f32.mrf.mxu0
    %v1187 = vadd.f32 0.0, %v1186
    %v1188 = vpop.f32.mrf.mxu0
    %v1189 = vadd.f32 0.0, %v1188
    %v1190 = vpop.f32.mrf.mxu0
    %v1191 = vadd.f32 0.0, %v1190
    %v1192 = vpop.f32.mrf.mxu0
    %v1193 = vadd.f32 0.0, %v1192
    %1194 = vmatprep.mubr.bf16.mxu0 0
    %1195 = vmatmul.mubr.bf16.gmra.mxu0 %v591
    %v1196 = vpop.f32.mrf.mxu0
    %v1197 = vadd.f32 0.0, %v1196
    %v1198 = vpop.f32.mrf.mxu0
    %v1199 = vadd.f32 0.0, %v1198
    %v1200 = vpop.f32.mrf.mxu0
    %v1201 = vadd.f32 0.0, %v1200
    %v1202 = vpop.f32.mrf.mxu0
    %v1203 = vadd.f32 0.0, %v1202
    %1204 = vdwg.mxu0
    %v1205 = vpack.c.bf16 %v995, %v991
    %v1206 = vpack.c.bf16 %v997, %v993
    %v1207 = vpack.c.bf16 %v1135, %v1131
    %v1208 = vpack.c.bf16 %v1137, %v1133
    %1209 = vmatprep.subr.bf16.mxu0 0
    %1210 = vmatpush1.bf16.msra.mxu0 0
    %1211 = vmatprep.subr.bf16.mxu0 0
    %1212 = vmatpush1.bf16.msra.mxu0 0
    %1213 = vmatprep.subr.bf16.mxu0 0
    %1214 = vmatpush1.bf16.msra.mxu0 0
    %1215 = vmatprep.subr.bf16.mxu0 0
    %1216 = vmatpush1.bf16.msra.mxu0 0
    %1217 = vmatprep.subr.bf16.mxu0 0
    %1218 = vmatpush1.bf16.msra.mxu0 0
    %1219 = vmatprep.subr.bf16.mxu0 0
    %1220 = vmatpush1.bf16.msra.mxu0 0
    %1221 = vmatprep.subr.bf16.mxu0 %v1208
    %1222 = vmatpush1.bf16.msra.mxu0 %v1207
    %1223 = vmatprep.subr.bf16.mxu0 %v1206
    %1224 = vmatpush1.bf16.msra.mxu0 %v1205
    %1225 = vmatprep.subr.bf16.mxu0 0
    %1226 = vmatpush2.bf16.msra.mxu0 0
    %1227 = vmatprep.subr.bf16.mxu0 0
    %1228 = vmatpush2.bf16.msra.mxu0 0
    %1229 = vmatprep.subr.bf16.mxu0 0
    %1230 = vmatpush2.bf16.msra.mxu0 0
    %1231 = vmatprep.subr.bf16.mxu0 0
    %1232 = vmatpush2.bf16.msra.mxu0 0
    %1233 = vmatprep.subr.bf16.mxu0 0
    %1234 = vmatpush2.bf16.msra.mxu0 0
    %1235 = vmatprep.subr.bf16.mxu0 0
    %1236 = vmatpush2.bf16.msra.mxu0 0
    %1237 = vmatprep.subr.bf16.mxu0 0
    %1238 = vmatpush2.bf16.msra.mxu0 0
    %1239 = vmatprep.subr.bf16.mxu0 0
    %1240 = vmatpush2.bf16.msra.mxu0 0
    %1241 = vmatprep.mubr.bf16.mxu0 0
    %1242 = vmatmul.mubr.bf16.gmra.mxu0 %v662
    %v1243 = vpop.f32.mrf.mxu0
    %v1244 = vadd.f32 %v1187, %v1243
    %v1245 = vpop.f32.mrf.mxu0
    %v1246 = vadd.f32 %v1189, %v1245
    %v1247 = vpop.f32.mrf.mxu0
    %v1248 = vadd.f32 %v1191, %v1247
    %v1249 = vpop.f32.mrf.mxu0
    %v1250 = vadd.f32 %v1193, %v1249
    %1251 = vmatprep.mubr.bf16.mxu0 0
    %1252 = vmatmul.mubr.bf16.gmra.mxu0 %v665
    %v1253 = vpop.f32.mrf.mxu0
    %v1254 = vadd.f32 %v1197, %v1253
    %v1255 = vpop.f32.mrf.mxu0
    %v1256 = vadd.f32 %v1199, %v1255
    %v1257 = vpop.f32.mrf.mxu0
    %v1258 = vadd.f32 %v1201, %v1257
    %v1259 = vpop.f32.mrf.mxu0
    %v1260 = vadd.f32 %v1203, %v1259
    %1261 = vdwg.mxu0
    %v1262 = vxor.u32 %v1244, 2147483648
    %v1263 = vxor.u32 %v1248, 2147483648
    %v1264 = vxor.u32 %v1254, 2147483648
    %v1265 = vxor.u32 %v1258, 2147483648
    %v1266 = vmul.f32 %v1262, 1.442695
    %v1267 = vpow.pop %v1266
    %v1268 = vmul.f32 %v1263, 1.442695
    %v1269 = vpow.pop %v1268
    %v1270 = vmul.f32 %v1264, 1.442695
    %v1271 = vpow.pop %v1270
    %v1272 = vmul.f32 %v1265, 1.442695
    %v1273 = vpow.pop %v1272
    %v1274 = vadd.f32 %v1267, 1.0
    %v1275 = vadd.f32 %v1269, 1.0
    %v1276 = vadd.f32 %v1271, 1.0
    %v1277 = vadd.f32 %v1273, 1.0
    %v1278 = vrcp.pop %v1274
    %v1279 = vmul.f32 1.0, %v1278
    %v1280 = vrcp.pop %v1275
    %v1281 = vmul.f32 1.0, %v1280
    %v1282 = vrcp.pop %v1276
    %v1283 = vmul.f32 1.0, %v1282
    %v1284 = vrcp.pop %v1277
    %v1285 = vmul.f32 1.0, %v1284
    %v1286 = vmax.f32 %v1246, 0.0
    %v1287 = vmax.f32 %v1250, 0.0
    %v1288 = vmax.f32 %v1256, 0.0
    %v1289 = vmax.f32 %v1260, 0.0
    %v1290 = vand.u32 2147483647, %v1246
    %v1291 = vand.u32 2147483647, %v1250
    %v1292 = vand.u32 2147483647, %v1256
    %v1293 = vand.u32 2147483647, %v1260
    %v1294 = vsub.f32 0.0, %v1290
    %v1295 = vsub.f32 0.0, %v1291
    %v1296 = vsub.f32 0.0, %v1292
    %v1297 = vsub.f32 0.0, %v1293
    %v1298 = vmul.f32 %v1294, 1.442695
    %v1299 = vpow.pop %v1298
    %v1300 = vmul.f32 %v1295, 1.442695
    %v1301 = vpow.pop %v1300
    %v1302 = vmul.f32 %v1296, 1.442695
    %v1303 = vpow.pop %v1302
    %v1304 = vmul.f32 %v1297, 1.442695
    %v1305 = vpow.pop %v1304
    %v1306 = vadd.f32 %v1299, 1.0
    %v1307 = vlog2.pop %v1306
    %v1308 = vmul.f32 %v1307, 0.6931472
    %v1309 = vmul.f32 -0.5, %v1299
    %v1310 = vadd.f32 %v1309, 1.0
    %v1311 = vmul.f32 %v1310, %v1299
    %v1312 = vand.u32 2147483647, %v1299
    %vm1313 = vcmp.lt.f32.partialorder %v1312, 0.0004427343
    %v1314 = vsel %vm1313, %v1311, %v1308
    %v1315 = vadd.f32 %v1301, 1.0
    %v1316 = vlog2.pop %v1315
    %v1317 = vmul.f32 %v1316, 0.6931472
    %v1318 = vmul.f32 -0.5, %v1301
    %v1319 = vadd.f32 %v1318, 1.0
    %v1320 = vmul.f32 %v1319, %v1301
    %v1321 = vand.u32 2147483647, %v1301
    %vm1322 = vcmp.lt.f32.partialorder %v1321, 0.0004427343
    %v1323 = vsel %vm1322, %v1320, %v1317
    %v1324 = vadd.f32 %v1303, 1.0
    %v1325 = vlog2.pop %v1324
    %v1326 = vmul.f32 %v1325, 0.6931472
    %v1327 = vmul.f32 -0.5, %v1303
    %v1328 = vadd.f32 %v1327, 1.0
    %v1329 = vmul.f32 %v1328, %v1303
    %v1330 = vand.u32 2147483647, %v1303
    %vm1331 = vcmp.lt.f32.partialorder %v1330, 0.0004427343
    %v1332 = vsel %vm1331, %v1329, %v1326
    %v1333 = vadd.f32 %v1305, 1.0
    %v1334 = vlog2.pop %v1333
    %v1335 = vmul.f32 %v1334, 0.6931472
    %v1336 = vmul.f32 -0.5, %v1305
    %v1337 = vadd.f32 %v1336, 1.0
    %v1338 = vmul.f32 %v1337, %v1305
    %v1339 = vand.u32 2147483647, %v1305
    %vm1340 = vcmp.lt.f32.partialorder %v1339, 0.0004427343
    %v1341 = vsel %vm1340, %v1338, %v1335
    %v1342 = vadd.f32 %v1286, %v1314
    %v1343 = vadd.f32 %v1287, %v1323
    %v1344 = vadd.f32 %v1288, %v1332
    %v1345 = vadd.f32 %v1289, %v1341
    %v1346 = vmul.f32 %v1279, %v1342
    %v1347 = vmul.f32 %v1281, %v1343
    %v1348 = vmul.f32 %v1283, %v1344
    %v1349 = vmul.f32 %v1285, %v1345
    %v1350 = vpack.c.bf16 %v1347, %v1346
    %v1351 = vpack.c.bf16 %v1349, %v1348
    %1352 = vmatprep.subr.bf16.mxu0 0
    %1353 = vmatpush1.bf16.msra.mxu0 0
    %1354 = vmatprep.subr.bf16.mxu0 0
    %1355 = vmatpush1.bf16.msra.mxu0 0
    %1356 = vmatprep.subr.bf16.mxu0 0
    %1357 = vmatpush1.bf16.msra.mxu0 0
    %1358 = vmatprep.subr.bf16.mxu0 0
    %1359 = vmatpush1.bf16.msra.mxu0 0
    %1360 = vmatprep.subr.bf16.mxu0 0
    %1361 = vmatpush1.bf16.msra.mxu0 0
    %1362 = vmatprep.subr.bf16.mxu0 0
    %1363 = vmatpush1.bf16.msra.mxu0 0
    %1364 = vmatprep.subr.bf16.mxu0 0
    %1365 = vmatpush1.bf16.msra.mxu0 %v1351
    %1366 = vmatprep.subr.bf16.mxu0 0
    %1367 = vmatpush1.bf16.msra.mxu0 %v1350
    %1368 = vmatprep.subr.bf16.mxu0 0
    %1369 = vmatpush2.bf16.msra.mxu0 0
    %1370 = vmatprep.subr.bf16.mxu0 0
    %1371 = vmatpush2.bf16.msra.mxu0 0
    %1372 = vmatprep.subr.bf16.mxu0 0
    %1373 = vmatpush2.bf16.msra.mxu0 0
    %1374 = vmatprep.subr.bf16.mxu0 0
    %1375 = vmatpush2.bf16.msra.mxu0 0
    %1376 = vmatprep.subr.bf16.mxu0 0
    %1377 = vmatpush2.bf16.msra.mxu0 0
    %1378 = vmatprep.subr.bf16.mxu0 0
    %1379 = vmatpush2.bf16.msra.mxu0 0
    %1380 = vmatprep.subr.bf16.mxu0 0
    %1381 = vmatpush2.bf16.msra.mxu0 0
    %1382 = vmatprep.subr.bf16.mxu0 0
    %1383 = vmatpush2.bf16.msra.mxu0 0
    %1384 = vmatprep.mubr.bf16.mxu0 0
    %1385 = vmatmul.mubr.bf16.gmra.mxu0 %v811
    %v1386 = vpop.f32.mrf.mxu0
    %v1387 = vadd.f32 0.0, %v1386
    %v1388 = vpop.f32.mrf.mxu0
    %v1389 = vpop.f32.mrf.mxu0
    %v1390 = vadd.f32 0.0, %v1389
    %v1391 = vpop.f32.mrf.mxu0
    %1392 = vdwg.mxu0
    %v1393 = vadd.f32 %v856, %v1387
    %v1394 = vadd.f32 %v857, %v1390
    %v1395 = vmax.f32 %v1393, 0.0
    %v1396 = vmax.f32 %v1394, 0.0
    %1397 = vst [vmem:[#allocation7] sm:$0xff] %v1395
    %1398 = vst [vmem:[#allocation7 + $0x8] sm:$0xff] %v1396
    // Predicated region
    $region58: #{tpu_custom_call.1} parent=1 // pred_check
      _
    $region59: #{tpu_custom_call.1} parent=1 // pred_check_branch
      %1400 = sbr.rel (0) target = $region61
    $region60: #{tpu_custom_call.1} parent=1 // pred_region
      %s1402 = ssub.s32 256, 256
      %1403 = vsyncadd [#allocation4], %s1402
      %s1404 = sshll.u32 [#allocation7], 4
      %s1405 = int_to_ptr.vmem [resolvable:$true] %s1404
      %1410 = dma.vmem_to_hbm [thread:$0]  %s1405, 256, %s12, [#allocation4], 128, 128, 8
    $region61: #{tpu_custom_call.1} parent=1 // pred_fallthru
      _
    // Predicated region
    $region62: #{tpu_custom_call.1} parent=1 // pred_check
      _
    $region63: #{tpu_custom_call.1} parent=1 // pred_check_branch
      %1412 = sbr.rel (0) target = $region65
    $region64: #{tpu_custom_call.1} parent=1 // pred_region
      %1413 = dma.done [#allocation4], 256
    $region65: #{tpu_custom_call.1} parent=1 // pred_fallthru
      _
    %1414 = vsyncpa [#allocation3], 1
    %1415 = vsyncpa [#allocation6], 1
    %1416 = vsyncpa [#allocation4], 1

</llo_original>
